<compile_context>
chip_gen: v7x
topology: tpu7x:2x2x1
jax: 0.10.0
libtpu: 0.0.40
codegen_flags: <defaults>
</compile_context>

<pallas_src>
import functools

import jax
import jax.numpy as jnp
from jax.experimental import pallas as pl
from jax.experimental.pallas import tpu as pltpu

# ---- small synthetic Qwen3-like config (shapes follow the module __init__) ----
HIDDEN_SIZE = 64
NUM_ATTENTION_HEADS = 4
NUM_KEY_VALUE_HEADS = 2
HEAD_DIM = 32
RMS_NORM_EPS = 1e-6
ROPE_THETA = 10000.0
ATTENTION_BIAS = False  # Qwen3 uses no bias in q/k/v/o projections


# ------------------------------ fused kernel ------------------------------- #

def _fused_attention_kernel(x_ref, wqkv_ref, wo_ref, gamma_ref, cos_ref,
                            sin_ref, rotp_ref, bd_ref, mask_ref,
                            o_ref, pw_ref, *, scaling, eps, n_heads,
                            n_kv_heads, head_dim):
    D = head_dim
    groups = n_heads // n_kv_heads

    x = x_ref[0].astype(jnp.float32)                              # (S, H)

    # Fused QKV projection: one MXU matmul with a 256-lane-wide output slab.
    qkv = jnp.dot(x, wqkv_ref[...], preferred_element_type=jnp.float32)

    # Per-head RMSNorm on the whole slab, lane-dense: (x*x) @ block-diag ones
    # broadcasts each head's sum-of-squares to every lane of that head.
    # (v lanes also get "normed" but are never read back — v is taken raw.)
    ss = jnp.dot(qkv * qkv, bd_ref[...], preferred_element_type=jnp.float32)
    normed = qkv * jax.lax.rsqrt(ss * (1.0 / D) + eps) * gamma_ref[...]

    # RoPE, lane-dense: rotate_half within each D block == signed permutation
    # matmul (MXU), no lane-slice concatenate copies.
    rot = jnp.dot(normed, rotp_ref[...], preferred_element_type=jnp.float32)
    roped = normed * cos_ref[...] + rot * sin_ref[...]

    q = roped[:, : n_heads * D] * scaling        # pre-scale q (S*D, not S*S)
    k = roped[:, n_heads * D:(n_heads + n_kv_heads) * D]
    v = qkv[:, (n_heads + n_kv_heads) * D:]      # v: raw projection (no norm/rope)

    mask = mask_ref[0, 0].astype(jnp.float32)    # (S, S), one load per batch
    wo = wo_ref[...]                             # (nH*D, H), resident

    acc = jnp.zeros((x.shape[0], wo.shape[-1]), jnp.float32)
    for h in range(n_heads):                     # static unroll; GQA via h//groups
        kvh = h // groups
        qh = q[:, h * D:(h + 1) * D]
        kh = k[:, kvh * D:(kvh + 1) * D]
        vh = v[:, kvh * D:(kvh + 1) * D]
        # QK^T without an explicit transpose: contract the shared last dim.
        s = jax.lax.dot_general(qh, kh, (((1,), (1,)), ((), ())),
                                preferred_element_type=jnp.float32)
        s = s + mask
        m = jnp.max(s, axis=-1, keepdims=True)
        p = jnp.exp(s - m)
        p = p * pl.reciprocal(jnp.sum(p, axis=-1, keepdims=True), approx=True)
        pw_ref[0, h] = p.astype(pw_ref.dtype)    # module returns attn weights
        oh = jnp.dot(p, vh, preferred_element_type=jnp.float32)       # (S, D)
        # Fold the output projection per head (avoids a lane-concat copy).
        acc = acc + jnp.dot(oh, wo[h * D:(h + 1) * D, :],
                            preferred_element_type=jnp.float32)
    o_ref[0] = acc.astype(o_ref.dtype)


# ------------------------ full Qwen3Attention forward ---------------------- #

def qwen3_attention_forward(params, hidden_states, cos, sin, attention_mask):
    """Mirrors Qwen3Attention.forward (past_key_value=None, dropout=0)."""
    # TODO(synk): past_key_value (KV cache update) not modeled; prefill-only path.
    B, S, H = hidden_states.shape
    nH, nKV, D = NUM_ATTENTION_HEADS, NUM_KEY_VALUE_HEADS, HEAD_DIM
    n_blk = nH + 2 * nKV                      # head-sized blocks in fused qkv
    QKV = n_blk * D
    scaling = D ** -0.5

    # Single fused projection weight (H, QKV): [ q | k | v ].
    wqkv = jnp.concatenate([params["wq"], params["wk"], params["wv"]], axis=1)

    # Per-lane RMSNorm gamma: q_norm over q heads, k_norm over kv heads, 1 for v.
    gamma = jnp.concatenate([
        jnp.tile(params["q_norm_w"], nH),
        jnp.tile(params["k_norm_w"], nKV),
        jnp.ones((nKV * D,), jnp.float32),
    ]).reshape(1, QKV)

    # cos/sin tiled once across the head blocks -> (S, QKV); loaded once
    # (constant index_map), never broadcast per batch*head in HBM.
    cos_b = jnp.tile(cos.astype(jnp.float32), (1, n_blk))
    sin_b = jnp.tile(sin.astype(jnp.float32), (1, n_blk))

    # Signed permutation implementing rotate_half within each D block: y = x @ P.
    lane = jnp.arange(QKV)
    col = lane % D
    src = jnp.where(col < D // 2, lane + D // 2, lane - D // 2)
    sign = jnp.where(col < D // 2, -1.0, 1.0).astype(jnp.float32)
    rotp = (lane[:, None] == src[None, :]).astype(jnp.float32) * sign[None, :]

    # Block-diagonal ones: (x*x) @ bd broadcasts each head's sum of squares.
    bd = ((lane[:, None] // D) == (lane[None, :] // D)).astype(jnp.float32)

    kern = functools.partial(
        _fused_attention_kernel, scaling=scaling, eps=RMS_NORM_EPS,
        n_heads=nH, n_kv_heads=nKV, head_dim=D)

    out_shape = (jax.ShapeDtypeStruct((B, S, H), hidden_states.dtype),
                 jax.ShapeDtypeStruct((B, nH, S, S), hidden_states.dtype))

    out, attn_w = pl.pallas_call(
        kern,
        out_shape=out_shape,
        grid=(B,),
        in_specs=[
            pl.BlockSpec((1, S, H), lambda b: (b, 0, 0)),        # x
            pl.BlockSpec((H, QKV), lambda b: (0, 0)),            # wqkv (resident)
            pl.BlockSpec((nH * D, H), lambda b: (0, 0)),         # wo   (resident)
            pl.BlockSpec((1, QKV), lambda b: (0, 0)),            # gamma
            pl.BlockSpec((S, QKV), lambda b: (0, 0)),            # cos (once)
            pl.BlockSpec((S, QKV), lambda b: (0, 0)),            # sin (once)
            pl.BlockSpec((QKV, QKV), lambda b: (0, 0)),          # rotate_half perm
            pl.BlockSpec((QKV, QKV), lambda b: (0, 0)),          # block-diag ones
            pl.BlockSpec((1, 1, S, S), lambda b: (b, 0, 0, 0)),  # additive mask
        ],
        out_specs=(pl.BlockSpec((1, S, H), lambda b: (b, 0, 0)),
                   pl.BlockSpec((1, nH, S, S), lambda b: (b, 0, 0, 0))),
        compiler_params=pltpu.CompilerParams(
            dimension_semantics=("parallel",)),   # shard batch across TCs (v7x)
    )(hidden_states, wqkv, params["wo"], gamma, cos_b, sin_b, rotp, bd,
      attention_mask)
    return out, attn_w


# ----------------------------- pure-JAX reference --------------------------- #

def _rotate_half(x):
    half = x.shape[-1] // 2
    return jnp.concatenate([-x[..., half:], x[..., :half]], axis=-1)


def _rmsnorm(x, w, eps):
    xf = x.astype(jnp.float32)
    var = jnp.mean(xf * xf, axis=-1, keepdims=True)
    return w * (xf * jax.lax.rsqrt(var + eps)).astype(x.dtype)


def reference_forward(params, x, cos, sin, mask):
    B, S, H = x.shape
    nH, nKV, D = NUM_ATTENTION_HEADS, NUM_KEY_VALUE_HEADS, HEAD_DIM
    groups = nH // nKV
    scaling = D ** -0.5

    x2d = x.reshape(B * S, H)
    q = _rmsnorm((x2d @ params["wq"]).reshape(B, S, nH, D),
                 params["q_norm_w"], RMS_NORM_EPS).transpose(0, 2, 1, 3)
    k = _rmsnorm((x2d @ params["wk"]).reshape(B, S, nKV, D),
                 params["k_norm_w"], RMS_NORM_EPS).transpose(0, 2, 1, 3)
    v = (x2d @ params["wv"]).reshape(B, S, nKV, D).transpose(0, 2, 1, 3)

    cos_e, sin_e = cos[None, None], sin[None, None]
    q = q * cos_e + _rotate_half(q) * sin_e
    k = k * cos_e + _rotate_half(k) * sin_e

    kr = jnp.repeat(k, groups, axis=1)
    vr = jnp.repeat(v, groups, axis=1)
    s = jnp.einsum("bhqd,bhkd->bhqk", q, kr) * scaling + mask
    p = jax.nn.softmax(s.astype(jnp.float32), axis=-1)
    o = jnp.einsum("bhqk,bhkd->bhqd", p, vr)
    o = o.transpose(0, 2, 1, 3).reshape(B * S, nH * D)
    return (o @ params["wo"]).reshape(B, S, H), p


# --------------------------------- main ------------------------------------ #

def _make_rope(S, D, theta=ROPE_THETA):
    inv_freq = 1.0 / (theta ** (jnp.arange(0, D, 2, dtype=jnp.float32) / D))
    pos = jnp.arange(S, dtype=jnp.float32)
    freqs = pos[:, None] * inv_freq[None, :]                 # (S, D/2)
    emb = jnp.concatenate([freqs, freqs], axis=-1)           # (S, D)
    return jnp.cos(emb), jnp.sin(emb)


if __name__ == "__main__":
    B, S = 2, 8
    nH, nKV, D, H = NUM_ATTENTION_HEADS, NUM_KEY_VALUE_HEADS, HEAD_DIM, HIDDEN_SIZE

    key = jax.random.PRNGKey(0)
    kx, kq, kk, kv, ko, kqn, kkn = jax.random.split(key, 7)

    hidden_states = jax.random.normal(kx, (B, S, H), dtype=jnp.float32)
    # Linear weights stored pre-transposed: y = x @ W (W has shape (in, out)).
    params = {
        "wq": 0.05 * jax.random.normal(kq, (H, nH * D), dtype=jnp.float32),
        "wk": 0.05 * jax.random.normal(kk, (H, nKV * D), dtype=jnp.float32),
        "wv": 0.05 * jax.random.normal(kv, (H, nKV * D), dtype=jnp.float32),
        "wo": 0.05 * jax.random.normal(ko, (nH * D, H), dtype=jnp.float32),
        "q_norm_w": 1.0 + 0.1 * jax.random.normal(kqn, (D,), dtype=jnp.float32),
        "k_norm_w": 1.0 + 0.1 * jax.random.normal(kkn, (D,), dtype=jnp.float32),
    }

    cos, sin = _make_rope(S, D)                              # (S, D) each

    # additive causal mask (B, 1, S, S): 0 on/below diagonal, -1e9 above
    causal = jnp.tril(jnp.ones((S, S), dtype=jnp.bool_))
    attention_mask = jnp.where(causal, 0.0, -1e9).astype(jnp.float32)
    attention_mask = jnp.broadcast_to(attention_mask[None, None], (B, 1, S, S))

    out, attn_w = qwen3_attention_forward(params, hidden_states, cos, sin,
                                          attention_mask)
    out = jax.block_until_ready(out)
    attn_w = jax.block_until_ready(attn_w)

    ref_out, ref_w = reference_forward(params, hidden_states, cos, sin,
                                       attention_mask)

    assert out.shape == (B, S, H) and attn_w.shape == (B, nH, S, S)
    # tolerance 2e-3: EUP approximate reciprocal in the softmax denominator.
    assert jnp.allclose(out, ref_out, atol=2e-3, rtol=2e-3), "output mismatch"
    assert jnp.allclose(attn_w, ref_w, atol=2e-3, rtol=2e-3), "attn weights mismatch"

    print("KERNEL_OK")
</pallas_src>

<mosaic_0001>
module attributes {stable_mosaic.version = 11 : i64} {
  func.func @_fused_attention_kernel(%arg0: i32, %arg1: memref<1x8x64xf32, #tpu.memory_space<vmem>>, %arg2: memref<64x256xf32, #tpu.memory_space<vmem>>, %arg3: memref<128x64xf32, #tpu.memory_space<vmem>>, %arg4: memref<1x256xf32, #tpu.memory_space<vmem>>, %arg5: memref<8x256xf32, #tpu.memory_space<vmem>>, %arg6: memref<8x256xf32, #tpu.memory_space<vmem>>, %arg7: memref<256x256xf32, #tpu.memory_space<vmem>>, %arg8: memref<256x256xf32, #tpu.memory_space<vmem>>, %arg9: memref<1x1x8x8xf32, #tpu.memory_space<vmem>>, %arg10: memref<1x8x64xf32, #tpu.memory_space<vmem>>, %arg11: memref<1x4x8x8xf32, #tpu.memory_space<vmem>>) attributes {dimension_semantics = [#tpu.dimension_semantics<parallel>], iteration_bounds = array<i64: 2>, scalar_prefetch = 0 : i64, scratch_operands = 0 : i64, tpu.core_type = #tpu.core_type<tc>, window_params = [{transform_indices = @transform_0, window_bounds = array<i64: 1, 8, 64>}, {pipeline_mode = #tpu.pipeline_mode<synchronous>, transform_indices = @transform_1, window_bounds = array<i64: 64, 256>}, {pipeline_mode = #tpu.pipeline_mode<synchronous>, transform_indices = @transform_2, window_bounds = array<i64: 128, 64>}, {pipeline_mode = #tpu.pipeline_mode<synchronous>, transform_indices = @transform_3, window_bounds = array<i64: 1, 256>}, {pipeline_mode = #tpu.pipeline_mode<synchronous>, transform_indices = @transform_4, window_bounds = array<i64: 8, 256>}, {pipeline_mode = #tpu.pipeline_mode<synchronous>, transform_indices = @transform_5, window_bounds = array<i64: 8, 256>}, {pipeline_mode = #tpu.pipeline_mode<synchronous>, transform_indices = @transform_6, window_bounds = array<i64: 256, 256>}, {pipeline_mode = #tpu.pipeline_mode<synchronous>, transform_indices = @transform_7, window_bounds = array<i64: 256, 256>}, {transform_indices = @transform_8, window_bounds = array<i64: 1, 1, 8, 8>}, {transform_indices = @transform_9, window_bounds = array<i64: 1, 8, 64>}, {transform_indices = @transform_10, window_bounds = array<i64: 1, 4, 8, 8>}]} {
    %c0 = arith.constant 0 : index
    %c0_0 = arith.constant 0 : index
    %c0_1 = arith.constant 0 : index
    %0 = vector.load %arg1[%c0, %c0_0, %c0_1] : memref<1x8x64xf32, #tpu.memory_space<vmem>>, vector<1x8x64xf32>
    %1 = vector.shape_cast %0 : vector<1x8x64xf32> to vector<8x64xf32>
    %c0_2 = arith.constant 0 : index
    %c0_3 = arith.constant 0 : index
    %2 = vector.load %arg2[%c0_2, %c0_3] : memref<64x256xf32, #tpu.memory_space<vmem>>, vector<64x256xf32>
    %cst = arith.constant dense<0.000000e+00> : vector<8x256xf32>
    %3 = tpu.matmul %1, %2, %cst {dimension_numbers = #tpu.dot_dimension_numbers<[1], [0], [0], [1], [0, 0, 1, 1], [], []>} : vector<8x64xf32>, vector<64x256xf32>, vector<8x256xf32> -> vector<8x256xf32>
    %4 = arith.mulf %3, %3 : vector<8x256xf32>
    %c0_4 = arith.constant 0 : index
    %c0_5 = arith.constant 0 : index
    %5 = vector.load %arg8[%c0_4, %c0_5] : memref<256x256xf32, #tpu.memory_space<vmem>>, vector<256x256xf32>
    %cst_6 = arith.constant dense<0.000000e+00> : vector<8x256xf32>
    %6 = tpu.matmul %4, %5, %cst_6 {dimension_numbers = #tpu.dot_dimension_numbers<[1], [0], [0], [1], [0, 0, 1, 1], [], []>} : vector<8x256xf32>, vector<256x256xf32>, vector<8x256xf32> -> vector<8x256xf32>
    %cst_7 = arith.constant 3.125000e-02 : f32
    %7 = vector.broadcast %cst_7 : f32 to vector<8x256xf32>
    %8 = arith.mulf %6, %7 : vector<8x256xf32>
    %cst_8 = arith.constant 9.99999997E-7 : f32
    %9 = vector.broadcast %cst_8 : f32 to vector<8x256xf32>
    %10 = arith.addf %8, %9 : vector<8x256xf32>
    %11 = math.rsqrt %10 : vector<8x256xf32>
    %12 = arith.mulf %3, %11 : vector<8x256xf32>
    %c0_9 = arith.constant 0 : index
    %c0_10 = arith.constant 0 : index
    %13 = vector.load %arg4[%c0_9, %c0_10] : memref<1x256xf32, #tpu.memory_space<vmem>>, vector<1x256xf32>
    %14 = vector.broadcast %13 : vector<1x256xf32> to vector<8x256xf32>
    %15 = arith.mulf %12, %14 : vector<8x256xf32>
    %c0_11 = arith.constant 0 : index
    %c0_12 = arith.constant 0 : index
    %16 = vector.load %arg7[%c0_11, %c0_12] : memref<256x256xf32, #tpu.memory_space<vmem>>, vector<256x256xf32>
    %cst_13 = arith.constant dense<0.000000e+00> : vector<8x256xf32>
    %17 = tpu.matmul %15, %16, %cst_13 {dimension_numbers = #tpu.dot_dimension_numbers<[1], [0], [0], [1], [0, 0, 1, 1], [], []>} : vector<8x256xf32>, vector<256x256xf32>, vector<8x256xf32> -> vector<8x256xf32>
    %c0_14 = arith.constant 0 : index
    %c0_15 = arith.constant 0 : index
    %18 = vector.load %arg5[%c0_14, %c0_15] : memref<8x256xf32, #tpu.memory_space<vmem>>, vector<8x256xf32>
    %19 = arith.mulf %15, %18 : vector<8x256xf32>
    %c0_16 = arith.constant 0 : index
    %c0_17 = arith.constant 0 : index
    %20 = vector.load %arg6[%c0_16, %c0_17] : memref<8x256xf32, #tpu.memory_space<vmem>>, vector<8x256xf32>
    %21 = arith.mulf %17, %20 : vector<8x256xf32>
    %22 = arith.addf %19, %21 : vector<8x256xf32>
    %23 = vector.extract_strided_slice %22 {offsets = [0, 0], sizes = [8, 128], strides = [1, 1]} : vector<8x256xf32> to vector<8x128xf32>
    %cst_18 = arith.constant 0.176776692 : f32
    %24 = vector.broadcast %cst_18 : f32 to vector<8x128xf32>
    %25 = arith.mulf %23, %24 : vector<8x128xf32>
    %26 = vector.extract_strided_slice %22 {offsets = [0, 128], sizes = [8, 64], strides = [1, 1]} : vector<8x256xf32> to vector<8x64xf32>
    %27 = vector.extract_strided_slice %3 {offsets = [0, 192], sizes = [8, 64], strides = [1, 1]} : vector<8x256xf32> to vector<8x64xf32>
    %c0_19 = arith.constant 0 : index
    %c0_20 = arith.constant 0 : index
    %c0_21 = arith.constant 0 : index
    %c0_22 = arith.constant 0 : index
    %28 = vector.load %arg9[%c0_19, %c0_20, %c0_21, %c0_22] : memref<1x1x8x8xf32, #tpu.memory_space<vmem>>, vector<1x1x8x8xf32>
    %29 = vector.shape_cast %28 : vector<1x1x8x8xf32> to vector<8x8xf32>
    %c0_23 = arith.constant 0 : index
    %c0_24 = arith.constant 0 : index
    %30 = vector.load %arg3[%c0_23, %c0_24] : memref<128x64xf32, #tpu.memory_space<vmem>>, vector<128x64xf32>
    %cst_25 = arith.constant 0.000000e+00 : f32
    %31 = vector.broadcast %cst_25 : f32 to vector<8x64xf32>
    %32 = vector.extract_strided_slice %25 {offsets = [0, 0], sizes = [8, 32], strides = [1, 1]} : vector<8x128xf32> to vector<8x32xf32>
    %33 = vector.extract_strided_slice %26 {offsets = [0, 0], sizes = [8, 32], strides = [1, 1]} : vector<8x64xf32> to vector<8x32xf32>
    %34 = vector.extract_strided_slice %27 {offsets = [0, 0], sizes = [8, 32], strides = [1, 1]} : vector<8x64xf32> to vector<8x32xf32>
    %cst_26 = arith.constant dense<0.000000e+00> : vector<8x8xf32>
    %35 = tpu.matmul %32, %33, %cst_26 {dimension_numbers = #tpu.dot_dimension_numbers<[1], [1], [0], [0], [0, 0, 1, 0], [], []>} : vector<8x32xf32>, vector<8x32xf32>, vector<8x8xf32> -> vector<8x8xf32>
    %36 = arith.addf %35, %29 : vector<8x8xf32>
    %cst_27 = arith.constant dense<0xFF800000> : vector<8xf32>
    %37 = vector.multi_reduction <maximumf>, %36, %cst_27 [1] : vector<8x8xf32> to vector<8xf32>
    %38 = vector.shape_cast %37 : vector<8xf32> to vector<8x1xf32>
    %39 = vector.broadcast %38 : vector<8x1xf32> to vector<8x8xf32>
    %40 = arith.subf %36, %39 : vector<8x8xf32>
    %41 = math.exp %40 : vector<8x8xf32>
    %cst_28 = arith.constant dense<0.000000e+00> : vector<8xf32>
    %42 = vector.multi_reduction <add>, %41, %cst_28 [1] : vector<8x8xf32> to vector<8xf32>
    %43 = vector.shape_cast %42 : vector<8xf32> to vector<8x1xf32>
    %44 = tpu.reciprocal %43 {approx = true} : vector<8x1xf32> -> vector<8x1xf32>
    %45 = vector.broadcast %44 : vector<8x1xf32> to vector<8x8xf32>
    %46 = arith.mulf %41, %45 : vector<8x8xf32>
    %c0_29 = arith.constant 0 : index
    %c0_30 = arith.constant 0 : index
    %c0_31 = arith.constant 0 : index
    %c0_32 = arith.constant 0 : index
    %47 = vector.load %arg11[%c0_29, %c0_30, %c0_31, %c0_32] : memref<1x4x8x8xf32, #tpu.memory_space<vmem>>, vector<1x1x8x8xf32>
    %48 = vector.shape_cast %47 : vector<1x1x8x8xf32> to vector<8x8xf32>
    %49 = vector.shape_cast %46 : vector<8x8xf32> to vector<1x1x8x8xf32>
    tpu.vector_store %arg11[%c0_29, %c0_30, %c0_31, %c0_32], %49 {strides = array<i32>} : memref<1x4x8x8xf32, #tpu.memory_space<vmem>>, vector<1x1x8x8xf32>,
    %cst_33 = arith.constant dense<0.000000e+00> : vector<8x32xf32>
    %50 = tpu.matmul %46, %34, %cst_33 {dimension_numbers = #tpu.dot_dimension_numbers<[1], [0], [0], [1], [0, 0, 1, 1], [], []>} : vector<8x8xf32>, vector<8x32xf32>, vector<8x32xf32> -> vector<8x32xf32>
    %51 = vector.extract_strided_slice %30 {offsets = [0, 0], sizes = [32, 64], strides = [1, 1]} : vector<128x64xf32> to vector<32x64xf32>
    %cst_34 = arith.constant dense<0.000000e+00> : vector<8x64xf32>
    %52 = tpu.matmul %50, %51, %cst_34 {dimension_numbers = #tpu.dot_dimension_numbers<[1], [0], [0], [1], [0, 0, 1, 1], [], []>} : vector<8x32xf32>, vector<32x64xf32>, vector<8x64xf32> -> vector<8x64xf32>
    %53 = arith.addf %31, %52 : vector<8x64xf32>
    %54 = vector.extract_strided_slice %25 {offsets = [0, 32], sizes = [8, 32], strides = [1, 1]} : vector<8x128xf32> to vector<8x32xf32>
    %55 = vector.extract_strided_slice %26 {offsets = [0, 0], sizes = [8, 32], strides = [1, 1]} : vector<8x64xf32> to vector<8x32xf32>
    %56 = vector.extract_strided_slice %27 {offsets = [0, 0], sizes = [8, 32], strides = [1, 1]} : vector<8x64xf32> to vector<8x32xf32>
    %cst_35 = arith.constant dense<0.000000e+00> : vector<8x8xf32>
    %57 = tpu.matmul %54, %55, %cst_35 {dimension_numbers = #tpu.dot_dimension_numbers<[1], [1], [0], [0], [0, 0, 1, 0], [], []>} : vector<8x32xf32>, vector<8x32xf32>, vector<8x8xf32> -> vector<8x8xf32>
    %58 = arith.addf %57, %29 : vector<8x8xf32>
    %cst_36 = arith.constant dense<0xFF800000> : vector<8xf32>
    %59 = vector.multi_reduction <maximumf>, %58, %cst_36 [1] : vector<8x8xf32> to vector<8xf32>
    %60 = vector.shape_cast %59 : vector<8xf32> to vector<8x1xf32>
    %61 = vector.broadcast %60 : vector<8x1xf32> to vector<8x8xf32>
    %62 = arith.subf %58, %61 : vector<8x8xf32>
    %63 = math.exp %62 : vector<8x8xf32>
    %cst_37 = arith.constant dense<0.000000e+00> : vector<8xf32>
    %64 = vector.multi_reduction <add>, %63, %cst_37 [1] : vector<8x8xf32> to vector<8xf32>
    %65 = vector.shape_cast %64 : vector<8xf32> to vector<8x1xf32>
    %66 = tpu.reciprocal %65 {approx = true} : vector<8x1xf32> -> vector<8x1xf32>
    %67 = vector.broadcast %66 : vector<8x1xf32> to vector<8x8xf32>
    %68 = arith.mulf %63, %67 : vector<8x8xf32>
    %c0_38 = arith.constant 0 : index
    %c1 = arith.constant 1 : index
    %c0_39 = arith.constant 0 : index
    %c0_40 = arith.constant 0 : index
    %69 = vector.load %arg11[%c0_38, %c1, %c0_39, %c0_40] : memref<1x4x8x8xf32, #tpu.memory_space<vmem>>, vector<1x1x8x8xf32>
    %70 = vector.shape_cast %69 : vector<1x1x8x8xf32> to vector<8x8xf32>
    %71 = vector.shape_cast %68 : vector<8x8xf32> to vector<1x1x8x8xf32>
    tpu.vector_store %arg11[%c0_38, %c1, %c0_39, %c0_40], %71 {strides = array<i32>} : memref<1x4x8x8xf32, #tpu.memory_space<vmem>>, vector<1x1x8x8xf32>,
    %cst_41 = arith.constant dense<0.000000e+00> : vector<8x32xf32>
    %72 = tpu.matmul %68, %56, %cst_41 {dimension_numbers = #tpu.dot_dimension_numbers<[1], [0], [0], [1], [0, 0, 1, 1], [], []>} : vector<8x8xf32>, vector<8x32xf32>, vector<8x32xf32> -> vector<8x32xf32>
    %73 = vector.extract_strided_slice %30 {offsets = [32, 0], sizes = [32, 64], strides = [1, 1]} : vector<128x64xf32> to vector<32x64xf32>
    %cst_42 = arith.constant dense<0.000000e+00> : vector<8x64xf32>
    %74 = tpu.matmul %72, %73, %cst_42 {dimension_numbers = #tpu.dot_dimension_numbers<[1], [0], [0], [1], [0, 0, 1, 1], [], []>} : vector<8x32xf32>, vector<32x64xf32>, vector<8x64xf32> -> vector<8x64xf32>
    %75 = arith.addf %53, %74 : vector<8x64xf32>
    %76 = vector.extract_strided_slice %25 {offsets = [0, 64], sizes = [8, 32], strides = [1, 1]} : vector<8x128xf32> to vector<8x32xf32>
    %77 = vector.extract_strided_slice %26 {offsets = [0, 32], sizes = [8, 32], strides = [1, 1]} : vector<8x64xf32> to vector<8x32xf32>
    %78 = vector.extract_strided_slice %27 {offsets = [0, 32], sizes = [8, 32], strides = [1, 1]} : vector<8x64xf32> to vector<8x32xf32>
    %cst_43 = arith.constant dense<0.000000e+00> : vector<8x8xf32>
    %79 = tpu.matmul %76, %77, %cst_43 {dimension_numbers = #tpu.dot_dimension_numbers<[1], [1], [0], [0], [0, 0, 1, 0], [], []>} : vector<8x32xf32>, vector<8x32xf32>, vector<8x8xf32> -> vector<8x8xf32>
    %80 = arith.addf %79, %29 : vector<8x8xf32>
    %cst_44 = arith.constant dense<0xFF800000> : vector<8xf32>
    %81 = vector.multi_reduction <maximumf>, %80, %cst_44 [1] : vector<8x8xf32> to vector<8xf32>
    %82 = vector.shape_cast %81 : vector<8xf32> to vector<8x1xf32>
    %83 = vector.broadcast %82 : vector<8x1xf32> to vector<8x8xf32>
    %84 = arith.subf %80, %83 : vector<8x8xf32>
    %85 = math.exp %84 : vector<8x8xf32>
    %cst_45 = arith.constant dense<0.000000e+00> : vector<8xf32>
    %86 = vector.multi_reduction <add>, %85, %cst_45 [1] : vector<8x8xf32> to vector<8xf32>
    %87 = vector.shape_cast %86 : vector<8xf32> to vector<8x1xf32>
    %88 = tpu.reciprocal %87 {approx = true} : vector<8x1xf32> -> vector<8x1xf32>
    %89 = vector.broadcast %88 : vector<8x1xf32> to vector<8x8xf32>
    %90 = arith.mulf %85, %89 : vector<8x8xf32>
    %c0_46 = arith.constant 0 : index
    %c2 = arith.constant 2 : index
    %c0_47 = arith.constant 0 : index
    %c0_48 = arith.constant 0 : index
    %91 = vector.load %arg11[%c0_46, %c2, %c0_47, %c0_48] : memref<1x4x8x8xf32, #tpu.memory_space<vmem>>, vector<1x1x8x8xf32>
    %92 = vector.shape_cast %91 : vector<1x1x8x8xf32> to vector<8x8xf32>
    %93 = vector.shape_cast %90 : vector<8x8xf32> to vector<1x1x8x8xf32>
    tpu.vector_store %arg11[%c0_46, %c2, %c0_47, %c0_48], %93 {strides = array<i32>} : memref<1x4x8x8xf32, #tpu.memory_space<vmem>>, vector<1x1x8x8xf32>,
    %cst_49 = arith.constant dense<0.000000e+00> : vector<8x32xf32>
    %94 = tpu.matmul %90, %78, %cst_49 {dimension_numbers = #tpu.dot_dimension_numbers<[1], [0], [0], [1], [0, 0, 1, 1], [], []>} : vector<8x8xf32>, vector<8x32xf32>, vector<8x32xf32> -> vector<8x32xf32>
    %95 = vector.extract_strided_slice %30 {offsets = [64, 0], sizes = [32, 64], strides = [1, 1]} : vector<128x64xf32> to vector<32x64xf32>
    %cst_50 = arith.constant dense<0.000000e+00> : vector<8x64xf32>
    %96 = tpu.matmul %94, %95, %cst_50 {dimension_numbers = #tpu.dot_dimension_numbers<[1], [0], [0], [1], [0, 0, 1, 1], [], []>} : vector<8x32xf32>, vector<32x64xf32>, vector<8x64xf32> -> vector<8x64xf32>
    %97 = arith.addf %75, %96 : vector<8x64xf32>
    %98 = vector.extract_strided_slice %25 {offsets = [0, 96], sizes = [8, 32], strides = [1, 1]} : vector<8x128xf32> to vector<8x32xf32>
    %99 = vector.extract_strided_slice %26 {offsets = [0, 32], sizes = [8, 32], strides = [1, 1]} : vector<8x64xf32> to vector<8x32xf32>
    %100 = vector.extract_strided_slice %27 {offsets = [0, 32], sizes = [8, 32], strides = [1, 1]} : vector<8x64xf32> to vector<8x32xf32>
    %cst_51 = arith.constant dense<0.000000e+00> : vector<8x8xf32>
    %101 = tpu.matmul %98, %99, %cst_51 {dimension_numbers = #tpu.dot_dimension_numbers<[1], [1], [0], [0], [0, 0, 1, 0], [], []>} : vector<8x32xf32>, vector<8x32xf32>, vector<8x8xf32> -> vector<8x8xf32>
    %102 = arith.addf %101, %29 : vector<8x8xf32>
    %cst_52 = arith.constant dense<0xFF800000> : vector<8xf32>
    %103 = vector.multi_reduction <maximumf>, %102, %cst_52 [1] : vector<8x8xf32> to vector<8xf32>
    %104 = vector.shape_cast %103 : vector<8xf32> to vector<8x1xf32>
    %105 = vector.broadcast %104 : vector<8x1xf32> to vector<8x8xf32>
    %106 = arith.subf %102, %105 : vector<8x8xf32>
    %107 = math.exp %106 : vector<8x8xf32>
    %cst_53 = arith.constant dense<0.000000e+00> : vector<8xf32>
    %108 = vector.multi_reduction <add>, %107, %cst_53 [1] : vector<8x8xf32> to vector<8xf32>
    %109 = vector.shape_cast %108 : vector<8xf32> to vector<8x1xf32>
    %110 = tpu.reciprocal %109 {approx = true} : vector<8x1xf32> -> vector<8x1xf32>
    %111 = vector.broadcast %110 : vector<8x1xf32> to vector<8x8xf32>
    %112 = arith.mulf %107, %111 : vector<8x8xf32>
    %c0_54 = arith.constant 0 : index
    %c3 = arith.constant 3 : index
    %c0_55 = arith.constant 0 : index
    %c0_56 = arith.constant 0 : index
    %113 = vector.load %arg11[%c0_54, %c3, %c0_55, %c0_56] : memref<1x4x8x8xf32, #tpu.memory_space<vmem>>, vector<1x1x8x8xf32>
    %114 = vector.shape_cast %113 : vector<1x1x8x8xf32> to vector<8x8xf32>
    %115 = vector.shape_cast %112 : vector<8x8xf32> to vector<1x1x8x8xf32>
    tpu.vector_store %arg11[%c0_54, %c3, %c0_55, %c0_56], %115 {strides = array<i32>} : memref<1x4x8x8xf32, #tpu.memory_space<vmem>>, vector<1x1x8x8xf32>,
    %cst_57 = arith.constant dense<0.000000e+00> : vector<8x32xf32>
    %116 = tpu.matmul %112, %100, %cst_57 {dimension_numbers = #tpu.dot_dimension_numbers<[1], [0], [0], [1], [0, 0, 1, 1], [], []>} : vector<8x8xf32>, vector<8x32xf32>, vector<8x32xf32> -> vector<8x32xf32>
    %117 = vector.extract_strided_slice %30 {offsets = [96, 0], sizes = [32, 64], strides = [1, 1]} : vector<128x64xf32> to vector<32x64xf32>
    %cst_58 = arith.constant dense<0.000000e+00> : vector<8x64xf32>
    %118 = tpu.matmul %116, %117, %cst_58 {dimension_numbers = #tpu.dot_dimension_numbers<[1], [0], [0], [1], [0, 0, 1, 1], [], []>} : vector<8x32xf32>, vector<32x64xf32>, vector<8x64xf32> -> vector<8x64xf32>
    %119 = arith.addf %97, %118 : vector<8x64xf32>
    %c0_59 = arith.constant 0 : index
    %c0_60 = arith.constant 0 : index
    %c0_61 = arith.constant 0 : index
    %120 = vector.load %arg10[%c0_59, %c0_60, %c0_61] : memref<1x8x64xf32, #tpu.memory_space<vmem>>, vector<1x8x64xf32>
    %121 = vector.shape_cast %120 : vector<1x8x64xf32> to vector<8x64xf32>
    %122 = vector.shape_cast %119 : vector<8x64xf32> to vector<1x8x64xf32>
    tpu.vector_store %arg10[%c0_59, %c0_60, %c0_61], %122 {strides = array<i32>} : memref<1x8x64xf32, #tpu.memory_space<vmem>>, vector<1x8x64xf32>,
    return
  }
  func.func @transform_0(%arg0: i32) -> (i32, i32, i32) {
    %c0_i32 = arith.constant 0 : i32
    %c0_i32_0 = arith.constant 0 : i32
    %c0_i32_1 = arith.constant 0 : i32
    return %arg0, %c0_i32, %c0_i32_0 : i32, i32, i32
  }
  func.func @transform_1(%arg0: i32) -> (i32, i32) {
    %c0_i32 = arith.constant 0 : i32
    %c0_i32_0 = arith.constant 0 : i32
    %c0_i32_1 = arith.constant 0 : i32
    return %c0_i32, %c0_i32_0 : i32, i32
  }
  func.func @transform_2(%arg0: i32) -> (i32, i32) {
    %c0_i32 = arith.constant 0 : i32
    %c0_i32_0 = arith.constant 0 : i32
    %c0_i32_1 = arith.constant 0 : i32
    return %c0_i32, %c0_i32_0 : i32, i32
  }
  func.func @transform_3(%arg0: i32) -> (i32, i32) {
    %c0_i32 = arith.constant 0 : i32
    %c0_i32_0 = arith.constant 0 : i32
    %c0_i32_1 = arith.constant 0 : i32
    return %c0_i32, %c0_i32_0 : i32, i32
  }
  func.func @transform_4(%arg0: i32) -> (i32, i32) {
    %c0_i32 = arith.constant 0 : i32
    %c0_i32_0 = arith.constant 0 : i32
    %c0_i32_1 = arith.constant 0 : i32
    return %c0_i32, %c0_i32_0 : i32, i32
  }
  func.func @transform_5(%arg0: i32) -> (i32, i32) {
    %c0_i32 = arith.constant 0 : i32
    %c0_i32_0 = arith.constant 0 : i32
    %c0_i32_1 = arith.constant 0 : i32
    return %c0_i32, %c0_i32_0 : i32, i32
  }
  func.func @transform_6(%arg0: i32) -> (i32, i32) {
    %c0_i32 = arith.constant 0 : i32
    %c0_i32_0 = arith.constant 0 : i32
    %c0_i32_1 = arith.constant 0 : i32
    return %c0_i32, %c0_i32_0 : i32, i32
  }
  func.func @transform_7(%arg0: i32) -> (i32, i32) {
    %c0_i32 = arith.constant 0 : i32
    %c0_i32_0 = arith.constant 0 : i32
    %c0_i32_1 = arith.constant 0 : i32
    return %c0_i32, %c0_i32_0 : i32, i32
  }
  func.func @transform_8(%arg0: i32) -> (i32, i32, i32, i32) {
    %c0_i32 = arith.constant 0 : i32
    %c0_i32_0 = arith.constant 0 : i32
    %c0_i32_1 = arith.constant 0 : i32
    %c0_i32_2 = arith.constant 0 : i32
    return %arg0, %c0_i32, %c0_i32_0, %c0_i32_1 : i32, i32, i32, i32
  }
  func.func @transform_9(%arg0: i32) -> (i32, i32, i32) {
    %c0_i32 = arith.constant 0 : i32
    %c0_i32_0 = arith.constant 0 : i32
    %c0_i32_1 = arith.constant 0 : i32
    return %arg0, %c0_i32, %c0_i32_0 : i32, i32, i32
  }
  func.func @transform_10(%arg0: i32) -> (i32, i32, i32, i32) {
    %c0_i32 = arith.constant 0 : i32
    %c0_i32_0 = arith.constant 0 : i32
    %c0_i32_1 = arith.constant 0 : i32
    %c0_i32_2 = arith.constant 0 : i32
    return %arg0, %c0_i32, %c0_i32_0, %c0_i32_1 : i32, i32, i32, i32
  }
}

</mosaic_0001>

<llo_original>
// kernel: tpu_custom_call.1
$region0: #{tpu_custom_call.1}
  #allocation0 [shape = 'u32[]', space=smem, size = 0x4, offset = 0x4, fixed_abs, tag = 'smem constant byte address 0x4 - core index']
  #allocation1 [shape = 'u32[144,128]{1,0:T(1,128)}', space=vmem, size = 0x12000, scoped, tag = 'internal scratch']
  %s0 = inlined_call_operand.vmem [shape: f32[2,8,64], index: 0, kind: input, shape index: {}]
  %s1 = inlined_call_operand.vmem [shape: f32[64,256], index: 1, kind: input, shape index: {}]
  %s2 = inlined_call_operand.vmem [shape: f32[128,64], index: 2, kind: input, shape index: {}]
  %s3 = inlined_call_operand.vmem [shape: f32[1,256], index: 3, kind: input, shape index: {}]
  %s4 = inlined_call_operand.vmem [shape: f32[8,256], index: 4, kind: input, shape index: {}]
  %s5 = inlined_call_operand.vmem [shape: f32[8,256], index: 5, kind: input, shape index: {}]
  %s6 = inlined_call_operand.hbm [shape: f32[256,256], index: 6, kind: input, shape index: {}]
  %s7 = inlined_call_operand.hbm [shape: f32[256,256], index: 7, kind: input, shape index: {}]
  %s8 = inlined_call_operand.vmem [shape: f32[2,1,8,8], index: 8, kind: input, shape index: {}]
  %s9 = inlined_call_operand.hbm [shape: f32[2,8,64], index: 9, kind: output, shape index: {0}]
  %s10 = inlined_call_operand.hbm [shape: f32[2,4,8,8], index: 10, kind: output, shape index: {1}]
  %11 = xla_tuple %s9, %s10
  %s12 = sld [smem:[#allocation0]]
  $region85: #{tpu_custom_call.1} parent=0
    _
  %s14 = ssub.s32 1, %s12
  %s15 = scalar_select 0, %s14, %s12
  $region1: #{tpu_custom_call.1} parent=0
    #allocation2 [shape = 'u8[262144]{0}', space=vmem, size = 0x40000, scoped, tag = 'input window, operand 6, single buffered']
    #allocation3 [shape = 's32[2]{0}', space=sflag, size = 0x8, scoped, tag = 'scoped memory for tpu_custom_call.1']
    #allocation4 [shape = 's32[2]{0}', space=sflag, size = 0x8, scoped, tag = 'scoped memory for tpu_custom_call.1']
    #allocation5 [shape = 'u8[262144]{0}', space=vmem, size = 0x40000, scoped, tag = 'input window, operand 7, single buffered']
    #allocation6 [shape = 's32[1]{0}', space=sflag, size = 0x4, scoped, tag = 'scoped memory for tpu_custom_call.1']
    #allocation7 [shape = 'u8[8192]{0}', space=vmem, size = 0x2000, scoped, tag = 'output window, operand 0']
    #allocation8 [shape = 'u8[32768]{0}', space=vmem, size = 0x8000, scoped, tag = 'output window, operand 1']
    #allocation9 [shape = 's32[2]{0}', space=sflag, size = 0x8, scoped, tag = 'scoped memory for tpu_custom_call.1']
    %16 = vsyncpa [#allocation3], 0
    %17 = vsyncpa [#allocation6], 0
    %18 = vsyncpa [#allocation4], 0
    %s19 = scalar_lea.sflag [#allocation4], 1
    %20 = vsyncpa %s19, 0
    %21 = vsyncpa [#allocation9], 0
    %s22 = scalar_lea.sflag [#allocation9], 1
    %23 = vsyncpa %s22, 0
    loop: start=0, step=1, limit=4
    $region2: #{tpu_custom_call.1} parent=1 // loop_pre_header
      _
    $region3: #{tpu_custom_call.1} parent=1 // loop_header
      %s25 = sphi 0, %s29
      %p26 = scmp.ge.s32.totalorder %s25, 4
      %s35 = sphi 0, %s37
      %s38 = sphi 0, %s35
      %s39 = sphi 0, %s38
      %s55 = sphi 0, %s39
      %s59 = sphi 0, %s59
      %s61 = sphi 0, %s59
      %s62 = sphi 0, %s61
      %s76 = sphi 0, %s62
      %s80 = sphi 0, %s80
      %s82 = sphi 0, %s80
      %s83 = sphi 0, %s82
      %s97 = sphi 0, %s83
      %s101 = sphi 0, %s101
      %s103 = sphi 0, %s101
      %s104 = sphi 0, %s103
      %s118 = sphi 0, %s104
      %s122 = sphi 0, %s122
      %s124 = sphi 0, %s122
      %s125 = sphi 0, %s124
      %s139 = sphi 0, %s125
      %s143 = sphi 0, %s143
      %s145 = sphi 0, %s143
      %s146 = sphi 0, %s145
      %s160 = sphi 0, %s146
      %s164 = sphi 0, %s164
      %s166 = sphi 0, %s164
      %s167 = sphi 0, %s166
      %s181 = sphi 0, %s167
      %s185 = sphi 0, %s185
      %s187 = sphi 0, %s185
      %s188 = sphi 0, %s187
      %s202 = sphi 0, %s188
      %s208 = sphi 0, %s210
      %s211 = sphi 0, %s208
      %s212 = sphi 0, %s211
      %s228 = sphi 0, %s212
      %s234 = sphi 0, %s236
      %s237 = sphi 0, %s234
      %s238 = sphi 0, %s237
      %s254 = sphi 0, %s238
      %s260 = sphi 0, %s262
      %s263 = sphi 0, %s260
      %s264 = sphi 0, %s263
      %s280 = sphi 0, %s264
    $region4: #{tpu_custom_call.1} parent=1 // loop_header_branch
      %28 = sbr.rel (%p26) target = $region8
    $region5: #{tpu_custom_call.1} parent=1 // loop_body
      %s30 = ssub.s32 %s25, 1
      %s31 = ssub.s32 %s25, 2
      %s32 = sadd.s32 %s25, 1
      %s33 = ssub.s32 %s25, %s32
      %p34 = scmp.eq.s32.totalorder %s33, 0
      %s36 = sadd.s32 %s35, 1
      %s37 = scalar_select %p34, %s35, %s36
      %p40 = pneg %p34
      %p41 = scmp.eq.s32.totalorder %s25, 1
      %p42 = por %p40, %p41
      %p43 = scmp.ne.s32.totalorder %s35, %s38
      %p44 = scmp.eq.s32.totalorder %s25, 0
      %p45 = por %p43, %p44
      %p46 = scmp.ne.s32.totalorder %s35, %s38
      %p47 = scmp.eq.s32.totalorder %s30, 1
      %p48 = por %p46, %p47
      %p49 = scmp.ne.s32.totalorder %s38, %s39
      %p50 = scmp.eq.s32.totalorder %s30, 0
      %p51 = por %p49, %p50
      %p52 = scmp.ne.s32.totalorder %s38, %s39
      %p53 = scmp.eq.s32.totalorder %s31, 1
      %p54 = por %p52, %p53
      %p56 = scmp.ne.s32.totalorder %s39, %s55
      %p57 = scmp.eq.s32.totalorder %s31, 0
      %p58 = por %p56, %p57
      %s60 = sadd.s32 %s59, 1
      %p63 = scmp.eq.s32.totalorder %s25, 1
      %p64 = scmp.ne.s32.totalorder %s59, %s61
      %p65 = scmp.eq.s32.totalorder %s25, 0
      %p66 = por %p64, %p65
      %p67 = scmp.ne.s32.totalorder %s59, %s61
      %p68 = scmp.eq.s32.totalorder %s30, 1
      %p69 = por %p67, %p68
      %p70 = scmp.ne.s32.totalorder %s61, %s62
      %p71 = scmp.eq.s32.totalorder %s30, 0
      %p72 = por %p70, %p71
      %p73 = scmp.ne.s32.totalorder %s61, %s62
      %p74 = scmp.eq.s32.totalorder %s31, 1
      %p75 = por %p73, %p74
      %p77 = scmp.ne.s32.totalorder %s62, %s76
      %p78 = scmp.eq.s32.totalorder %s31, 0
      %p79 = por %p77, %p78
      %s81 = sadd.s32 %s80, 1
      %p84 = scmp.eq.s32.totalorder %s25, 1
      %p85 = scmp.ne.s32.totalorder %s80, %s82
      %p86 = scmp.eq.s32.totalorder %s25, 0
      %p87 = por %p85, %p86
      %p88 = scmp.ne.s32.totalorder %s80, %s82
      %p89 = scmp.eq.s32.totalorder %s30, 1
      %p90 = por %p88, %p89
      %p91 = scmp.ne.s32.totalorder %s82, %s83
      %p92 = scmp.eq.s32.totalorder %s30, 0
      %p93 = por %p91, %p92
      %p94 = scmp.ne.s32.totalorder %s82, %s83
      %p95 = scmp.eq.s32.totalorder %s31, 1
      %p96 = por %p94, %p95
      %p98 = scmp.ne.s32.totalorder %s83, %s97
      %p99 = scmp.eq.s32.totalorder %s31, 0
      %p100 = por %p98, %p99
      %s102 = sadd.s32 %s101, 1
      %p105 = scmp.eq.s32.totalorder %s25, 1
      %p106 = scmp.ne.s32.totalorder %s101, %s103
      %p107 = scmp.eq.s32.totalorder %s25, 0
      %p108 = por %p106, %p107
      %p109 = scmp.ne.s32.totalorder %s101, %s103
      %p110 = scmp.eq.s32.totalorder %s30, 1
      %p111 = por %p109, %p110
      %p112 = scmp.ne.s32.totalorder %s103, %s104
      %p113 = scmp.eq.s32.totalorder %s30, 0
      %p114 = por %p112, %p113
      %p115 = scmp.ne.s32.totalorder %s103, %s104
      %p116 = scmp.eq.s32.totalorder %s31, 1
      %p117 = por %p115, %p116
      %p119 = scmp.ne.s32.totalorder %s104, %s118
      %p120 = scmp.eq.s32.totalorder %s31, 0
      %p121 = por %p119, %p120
      %s123 = sadd.s32 %s122, 1
      %p126 = scmp.eq.s32.totalorder %s25, 1
      %p127 = scmp.ne.s32.totalorder %s122, %s124
      %p128 = scmp.eq.s32.totalorder %s25, 0
      %p129 = por %p127, %p128
      %p130 = scmp.ne.s32.totalorder %s122, %s124
      %p131 = scmp.eq.s32.totalorder %s30, 1
      %p132 = por %p130, %p131
      %p133 = scmp.ne.s32.totalorder %s124, %s125
      %p134 = scmp.eq.s32.totalorder %s30, 0
      %p135 = por %p133, %p134
      %p136 = scmp.ne.s32.totalorder %s124, %s125
      %p137 = scmp.eq.s32.totalorder %s31, 1
      %p138 = por %p136, %p137
      %p140 = scmp.ne.s32.totalorder %s125, %s139
      %p141 = scmp.eq.s32.totalorder %s31, 0
      %p142 = por %p140, %p141
      %s144 = sadd.s32 %s143, 1
      %p147 = scmp.eq.s32.totalorder %s25, 1
      %p148 = scmp.ne.s32.totalorder %s143, %s145
      %p149 = scmp.eq.s32.totalorder %s25, 0
      %p150 = por %p148, %p149
      %p151 = scmp.ne.s32.totalorder %s143, %s145
      %p152 = scmp.eq.s32.totalorder %s30, 1
      %p153 = por %p151, %p152
      %p154 = scmp.ne.s32.totalorder %s145, %s146
      %p155 = scmp.eq.s32.totalorder %s30, 0
      %p156 = por %p154, %p155
      %p157 = scmp.ne.s32.totalorder %s145, %s146
      %p158 = scmp.eq.s32.totalorder %s31, 1
      %p159 = por %p157, %p158
      %p161 = scmp.ne.s32.totalorder %s146, %s160
      %p162 = scmp.eq.s32.totalorder %s31, 0
      %p163 = por %p161, %p162
      %s165 = sadd.s32 %s164, 1
      %p168 = scmp.eq.s32.totalorder %s25, 1
      %p169 = scmp.ne.s32.totalorder %s164, %s166
      %p170 = scmp.eq.s32.totalorder %s25, 0
      %p171 = por %p169, %p170
      %p172 = scmp.ne.s32.totalorder %s164, %s166
      %p173 = scmp.eq.s32.totalorder %s30, 1
      %p174 = por %p172, %p173
      %p175 = scmp.ne.s32.totalorder %s166, %s167
      %p176 = scmp.eq.s32.totalorder %s30, 0
      %p177 = por %p175, %p176
      %p178 = scmp.ne.s32.totalorder %s166, %s167
      %p179 = scmp.eq.s32.totalorder %s31, 1
      %p180 = por %p178, %p179
      %p182 = scmp.ne.s32.totalorder %s167, %s181
      %p183 = scmp.eq.s32.totalorder %s31, 0
      %p184 = por %p182, %p183
      %s186 = sadd.s32 %s185, 1
      %p189 = scmp.eq.s32.totalorder %s25, 1
      %p190 = scmp.ne.s32.totalorder %s185, %s187
      %p191 = scmp.eq.s32.totalorder %s25, 0
      %p192 = por %p190, %p191
      %p193 = scmp.ne.s32.totalorder %s185, %s187
      %p194 = scmp.eq.s32.totalorder %s30, 1
      %p195 = por %p193, %p194
      %p196 = scmp.ne.s32.totalorder %s187, %s188
      %p197 = scmp.eq.s32.totalorder %s30, 0
      %p198 = por %p196, %p197
      %p199 = scmp.ne.s32.totalorder %s187, %s188
      %p200 = scmp.eq.s32.totalorder %s31, 1
      %p201 = por %p199, %p200
      %p203 = scmp.ne.s32.totalorder %s188, %s202
      %p204 = scmp.eq.s32.totalorder %s31, 0
      %p205 = por %p203, %p204
      %s206 = ssub.s32 %s25, %s32
      %p207 = scmp.eq.s32.totalorder %s206, 0
      %s209 = sadd.s32 %s208, 1
      %s210 = scalar_select %p207, %s208, %s209
      %p213 = pneg %p207
      %p214 = scmp.eq.s32.totalorder %s25, 1
      %p215 = por %p213, %p214
      %p216 = scmp.ne.s32.totalorder %s208, %s211
      %p217 = scmp.eq.s32.totalorder %s25, 0
      %p218 = por %p216, %p217
      %p219 = scmp.ne.s32.totalorder %s208, %s211
      %p220 = scmp.eq.s32.totalorder %s30, 1
      %p221 = por %p219, %p220
      %p222 = scmp.ne.s32.totalorder %s211, %s212
      %p223 = scmp.eq.s32.totalorder %s30, 0
      %p224 = por %p222, %p223
      %p225 = scmp.ne.s32.totalorder %s211, %s212
      %p226 = scmp.eq.s32.totalorder %s31, 1
      %p227 = por %p225, %p226
      %p229 = scmp.ne.s32.totalorder %s212, %s228
      %p230 = scmp.eq.s32.totalorder %s31, 0
      %p231 = por %p229, %p230
      %s232 = ssub.s32 %s25, %s32
      %p233 = scmp.eq.s32.totalorder %s232, 0
      %s235 = sadd.s32 %s234, 1
      %s236 = scalar_select %p233, %s234, %s235
      %p239 = pneg %p233
      %p240 = scmp.eq.s32.totalorder %s25, 1
      %p241 = por %p239, %p240
      %p242 = scmp.ne.s32.totalorder %s234, %s237
      %p243 = scmp.eq.s32.totalorder %s25, 0
      %p244 = por %p242, %p243
      %p245 = scmp.ne.s32.totalorder %s234, %s237
      %p246 = scmp.eq.s32.totalorder %s30, 1
      %p247 = por %p245, %p246
      %p248 = scmp.ne.s32.totalorder %s237, %s238
      %p249 = scmp.eq.s32.totalorder %s30, 0
      %p250 = por %p248, %p249
      %p251 = scmp.ne.s32.totalorder %s237, %s238
      %p252 = scmp.eq.s32.totalorder %s31, 1
      %p253 = por %p251, %p252
      %p255 = scmp.ne.s32.totalorder %s238, %s254
      %p256 = scmp.eq.s32.totalorder %s31, 0
      %p257 = por %p255, %p256
      %s258 = ssub.s32 %s25, %s32
      %p259 = scmp.eq.s32.totalorder %s258, 0
      %s261 = sadd.s32 %s260, 1
      %s262 = scalar_select %p259, %s260, %s261
      %p265 = pneg %p259
      %p266 = scmp.eq.s32.totalorder %s25, 1
      %p267 = por %p265, %p266
      %p268 = scmp.ne.s32.totalorder %s260, %s263
      %p269 = scmp.eq.s32.totalorder %s25, 0
      %p270 = por %p268, %p269
      %p271 = scmp.ne.s32.totalorder %s260, %s263
      %p272 = scmp.eq.s32.totalorder %s30, 1
      %p273 = por %p271, %p272
      %p274 = scmp.ne.s32.totalorder %s263, %s264
      %p275 = scmp.eq.s32.totalorder %s30, 0
      %p276 = por %p274, %p275
      %p277 = scmp.ne.s32.totalorder %s263, %s264
      %p278 = scmp.eq.s32.totalorder %s31, 1
      %p279 = por %p277, %p278
      %p281 = scmp.ne.s32.totalorder %s264, %s280
      %p282 = scmp.eq.s32.totalorder %s31, 0
      %p283 = por %p281, %p282
      %p284 = scmp.le.s32.totalorder 1, %s25
      %p285 = scmp.lt.s32.totalorder %s25, 3
      %p286 = pnand %p284, %p285
      %p287 = pneg %p286
      // Predicated region
      $region9: #{tpu_custom_call.1} parent=5 // pred_check
        _
      $region10: #{tpu_custom_call.1} parent=5 // pred_check_branch
        %289 = sbr.rel (%p286) target = $region12
      $region11: #{tpu_custom_call.1} parent=5 // pred_region
        %s290 = ssub.s32 %s25, 1
        // Predicated region
        $region13: #{tpu_custom_call.1} parent=11 // pred_check
          %p291 = pneg %p72
        $region14: #{tpu_custom_call.1} parent=11 // pred_check_branch
          %293 = sbr.rel (%p291) target = $region16
        $region15: #{tpu_custom_call.1} parent=11 // pred_region
          _
        $region16: #{tpu_custom_call.1} parent=11 // pred_fallthru
          _
        // Predicated region
        $region17: #{tpu_custom_call.1} parent=11 // pred_check
          %p294 = pneg %p93
        $region18: #{tpu_custom_call.1} parent=11 // pred_check_branch
          %296 = sbr.rel (%p294) target = $region20
        $region19: #{tpu_custom_call.1} parent=11 // pred_region
          _
        $region20: #{tpu_custom_call.1} parent=11 // pred_fallthru
          _
        // Predicated region
        $region21: #{tpu_custom_call.1} parent=11 // pred_check
          %p297 = pneg %p114
        $region22: #{tpu_custom_call.1} parent=11 // pred_check_branch
          %299 = sbr.rel (%p297) target = $region24
        $region23: #{tpu_custom_call.1} parent=11 // pred_region
          _
        $region24: #{tpu_custom_call.1} parent=11 // pred_fallthru
          _
        // Predicated region
        $region25: #{tpu_custom_call.1} parent=11 // pred_check
          %p300 = pneg %p135
        $region26: #{tpu_custom_call.1} parent=11 // pred_check_branch
          %302 = sbr.rel (%p300) target = $region28
        $region27: #{tpu_custom_call.1} parent=11 // pred_region
          _
        $region28: #{tpu_custom_call.1} parent=11 // pred_fallthru
          _
        // Predicated region
        $region29: #{tpu_custom_call.1} parent=11 // pred_check
          %p303 = pneg %p156
        $region30: #{tpu_custom_call.1} parent=11 // pred_check_branch
          %305 = sbr.rel (%p303) target = $region32
        $region31: #{tpu_custom_call.1} parent=11 // pred_region
          _
        $region32: #{tpu_custom_call.1} parent=11 // pred_fallthru
          _
        // Predicated region
        $region33: #{tpu_custom_call.1} parent=11 // pred_check
          %p306 = pneg %p177
        $region34: #{tpu_custom_call.1} parent=11 // pred_check_branch
          %308 = sbr.rel (%p306) target = $region36
        $region35: #{tpu_custom_call.1} parent=11 // pred_region
          %s310 = ssub.s32 8192, 8192
          %311 = vsyncadd [#allocation3], %s310
          %s312 = sshll.u32 [#allocation2], 4
          %s313 = int_to_ptr.vmem [resolvable:$true] %s312
          %318 = dma.hbm_to_vmem [thread:$0]  %s6, 8192, %s313, [#allocation3], 256, 256, 16
        $region36: #{tpu_custom_call.1} parent=11 // pred_fallthru
          _
        // Predicated region
        $region37: #{tpu_custom_call.1} parent=11 // pred_check
          %p319 = pneg %p198
        $region38: #{tpu_custom_call.1} parent=11 // pred_check_branch
          %321 = sbr.rel (%p319) target = $region40
        $region39: #{tpu_custom_call.1} parent=11 // pred_region
          %s323 = ssub.s32 8192, 8192
          %324 = vsyncadd [#allocation6], %s323
          %s325 = sshll.u32 [#allocation5], 4
          %s326 = int_to_ptr.vmem [resolvable:$true] %s325
          %331 = dma.hbm_to_vmem [thread:$0]  %s7, 8192, %s326, [#allocation6], 256, 256, 16
        $region40: #{tpu_custom_call.1} parent=11 // pred_fallthru
          _
      $region12: #{tpu_custom_call.1} parent=5 // pred_fallthru
        _
      %p332 = scmp.lt.s32.totalorder %s25, 2
      // Predicated region
      $region41: #{tpu_custom_call.1} parent=5 // pred_check
        %p333 = pneg %p332
      $region42: #{tpu_custom_call.1} parent=5 // pred_check_branch
        %335 = sbr.rel (%p333) target = $region44
      $region43: #{tpu_custom_call.1} parent=5 // pred_region
        // Predicated region
        $region45: #{tpu_custom_call.1} parent=43 // pred_check
          %p336 = pneg %p45
        $region46: #{tpu_custom_call.1} parent=43 // pred_check_branch
          %338 = sbr.rel (%p336) target = $region48
        $region47: #{tpu_custom_call.1} parent=43 // pred_region
          %p339 = scmp.lt.s32.totalorder %s25, 1
          %s340 = scalar_select %p339, %s25, 1
          %s341 = smul.addr %s340, 8
          %s342 = scalar_lea.vmem %s0, %s341
        $region48: #{tpu_custom_call.1} parent=43 // pred_fallthru
          _
        // Predicated region
        $region49: #{tpu_custom_call.1} parent=43 // pred_check
          %p343 = pneg %p218
        $region50: #{tpu_custom_call.1} parent=43 // pred_check_branch
          %345 = sbr.rel (%p343) target = $region52
        $region51: #{tpu_custom_call.1} parent=43 // pred_region
          %p346 = scmp.lt.s32.totalorder %s25, 1
          %s347 = scalar_select %p346, %s25, 1
          %s348 = smul.addr %s347, 8
          %s349 = scalar_lea.vmem %s8, %s348
        $region52: #{tpu_custom_call.1} parent=43 // pred_fallthru
          _
      $region44: #{tpu_custom_call.1} parent=5 // pred_fallthru
        _
      %p350 = scmp.le.s32.totalorder 1, %s25
      %p351 = scmp.lt.s32.totalorder %s25, 3
      %p352 = pnand %p350, %p351
      %p353 = pneg %p352
      // Predicated region
      $region53: #{tpu_custom_call.1} parent=5 // pred_check
        _
      $region54: #{tpu_custom_call.1} parent=5 // pred_check_branch
        %355 = sbr.rel (%p352) target = $region56
      $region55: #{tpu_custom_call.1} parent=5 // pred_region
        %s356 = ssub.s32 %s25, 1
        // Predicated region
        $region57: #{tpu_custom_call.1} parent=55 // pred_check
          %p357 = pneg %p177
        $region58: #{tpu_custom_call.1} parent=55 // pred_check_branch
          %359 = sbr.rel (%p357) target = $region60
        $region59: #{tpu_custom_call.1} parent=55 // pred_region
          %360 = dma.done [#allocation3], 8192
        $region60: #{tpu_custom_call.1} parent=55 // pred_fallthru
          _
        // Predicated region
        $region61: #{tpu_custom_call.1} parent=55 // pred_check
          %p361 = pneg %p198
        $region62: #{tpu_custom_call.1} parent=55 // pred_check_branch
          %363 = sbr.rel (%p361) target = $region64
        $region63: #{tpu_custom_call.1} parent=55 // pred_region
          %364 = dma.done [#allocation6], 8192
        $region64: #{tpu_custom_call.1} parent=55 // pred_fallthru
          _
        %p365 = scmp.lt.s32.totalorder %s30, 1
        %s366 = scalar_select %p365, %s30, 1
        %s367 = smul.addr %s366, 8
        %s368 = scalar_lea.vmem %s0, %s367
        %p369 = pneg %p51
        %p370 = pneg %p48
        %p371 = pneg %p72
        %p372 = pneg %p69
        %p373 = pneg %p93
        %p374 = pneg %p90
        %p375 = pneg %p114
        %p376 = pneg %p111
        %p377 = pneg %p135
        %p378 = pneg %p132
        %p379 = pneg %p156
        %p380 = pneg %p153
        %p381 = pneg %p177
        %p382 = pneg %p174
        %p383 = pneg %p198
        %p384 = pneg %p195
        %p385 = scmp.lt.s32.totalorder %s30, 1
        %s386 = scalar_select %p385, %s30, 1
        %s387 = smul.addr %s386, 8
        %s388 = scalar_lea.vmem %s8, %s387
        %p389 = pneg %p224
        %p390 = pneg %p221
        %p391 = pneg %p250
        %p392 = pneg %p247
        %s393 = sand.u32 %s237, 1
        %s394 = scalar_lea.sflag [#allocation4], %s393
        %s395 = sand.u32 %s237, 1
        %s396 = smul.addr %s395, 8
        %s397 = scalar_lea.vmem [#allocation7], %s396
        %p398 = pneg %p276
        %p399 = pneg %p273
        %s400 = sand.u32 %s263, 1
        %s401 = scalar_lea.sflag [#allocation9], %s400
        %s402 = sand.u32 %s263, 1
        %s403 = smul.addr %s402, 32
        %s404 = scalar_lea.vmem [#allocation8], %s403
        %p405 = scmp.lt.s32.totalorder %s30, 1
        %s406 = scalar_select %p405, %s30, 1
        %s407 = smul.addr %s406, 8
        %s408 = scalar_lea.vmem %s0, %s407
        %p409 = scmp.lt.s32.totalorder %s30, 1
        %s410 = scalar_select %p409, %s30, 1
        %s411 = smul.addr %s410, 8
        %s412 = scalar_lea.vmem %s8, %s411
        %v413 = vld [vmem:[%s408] sm:$0xff]
        %v414 = vld [vmem:[%s1] sm:$0xff]
        %v415 = vld [vmem:[%s1 + $0x8] sm:$0xff]
        %v416 = vld [vmem:[%s1 + $0x10] sm:$0xff]
        %v417 = vld [vmem:[%s1 + $0x18] sm:$0xff]
        %v418 = vld [vmem:[%s1 + $0x20] sm:$0xff]
        %v419 = vld [vmem:[%s1 + $0x28] sm:$0xff]
        %v420 = vld [vmem:[%s1 + $0x30] sm:$0xff]
        %v421 = vld [vmem:[%s1 + $0x38] sm:$0xff]
        %v422 = vld [vmem:[%s1 + $0x40] sm:$0xff]
        %v423 = vld [vmem:[%s1 + $0x48] sm:$0xff]
        %v424 = vld [vmem:[%s1 + $0x50] sm:$0xff]
        %v425 = vld [vmem:[%s1 + $0x58] sm:$0xff]
        %v426 = vld [vmem:[%s1 + $0x60] sm:$0xff]
        %v427 = vld [vmem:[%s1 + $0x68] sm:$0xff]
        %v428 = vld [vmem:[%s1 + $0x70] sm:$0xff]
        %v429 = vld [vmem:[%s1 + $0x78] sm:$0xff]
        %vm430 = vcmask 523264
        %v432 = vsel %vm430, %v413, 0
        %434 = vmatprep.subr.mxu0 %v415
        %435 = vmatpush1.msra.mxu0 %v414
        %436 = vmatprep.subr.mxu0 %v417
        %437 = vmatpush1.msra.mxu0 %v416
        %438 = vmatprep.subr.mxu0 %v419
        %439 = vmatpush1.msra.mxu0 %v418
        %440 = vmatprep.subr.mxu0 %v421
        %441 = vmatpush1.msra.mxu0 %v420
        %442 = vmatprep.subr.mxu0 %v423
        %443 = vmatpush1.msra.mxu0 %v422
        %444 = vmatprep.subr.mxu0 %v425
        %445 = vmatpush1.msra.mxu0 %v424
        %446 = vmatprep.subr.mxu0 %v427
        %447 = vmatpush1.msra.mxu0 %v426
        %448 = vmatprep.subr.mxu0 %v429
        %449 = vmatpush1.msra.mxu0 %v428
        %450 = vmatprep.subr.mxu0 0.0
        %451 = vmatpush1.msra.mxu0 0.0
        %452 = vmatprep.subr.mxu0 0.0
        %453 = vmatpush1.msra.mxu0 0.0
        %454 = vmatprep.subr.mxu0 0.0
        %455 = vmatpush1.msra.mxu0 0.0
        %456 = vmatprep.subr.mxu0 0.0
        %457 = vmatpush1.msra.mxu0 0.0
        %458 = vmatprep.subr.mxu0 0.0
        %459 = vmatpush1.msra.mxu0 0.0
        %460 = vmatprep.subr.mxu0 0.0
        %461 = vmatpush1.msra.mxu0 0.0
        %462 = vmatprep.subr.mxu0 0.0
        %463 = vmatpush1.msra.mxu0 0.0
        %464 = vmatprep.subr.mxu0 0.0
        %465 = vmatpush1.msra.mxu0 0.0
        %466 = vmatprep.subr.mxu0 0.0
        %467 = vmatpush1.msra.mxu0 0.0
        %468 = vmatprep.subr.mxu0 0.0
        %469 = vmatpush1.msra.mxu0 0.0
        %470 = vmatprep.subr.mxu0 0.0
        %471 = vmatpush1.msra.mxu0 0.0
        %472 = vmatprep.subr.mxu0 0.0
        %473 = vmatpush1.msra.mxu0 0.0
        %474 = vmatprep.subr.mxu0 0.0
        %475 = vmatpush1.msra.mxu0 0.0
        %476 = vmatprep.subr.mxu0 0.0
        %477 = vmatpush1.msra.mxu0 0.0
        %478 = vmatprep.subr.mxu0 0.0
        %479 = vmatpush1.msra.mxu0 0.0
        %480 = vmatprep.subr.mxu0 0.0
        %481 = vmatpush1.msra.mxu0 0.0
        %482 = vmatprep.subr.mxu0 0.0
        %483 = vmatpush1.msra.mxu0 0.0
        %484 = vmatprep.subr.mxu0 0.0
        %485 = vmatpush1.msra.mxu0 0.0
        %486 = vmatprep.subr.mxu0 0.0
        %487 = vmatpush1.msra.mxu0 0.0
        %488 = vmatprep.subr.mxu0 0.0
        %489 = vmatpush1.msra.mxu0 0.0
        %490 = vmatprep.subr.mxu0 0.0
        %491 = vmatpush1.msra.mxu0 0.0
        %492 = vmatprep.subr.mxu0 0.0
        %493 = vmatpush1.msra.mxu0 0.0
        %494 = vmatprep.subr.mxu0 0.0
        %495 = vmatpush1.msra.mxu0 0.0
        %496 = vmatprep.subr.mxu0 0.0
        %497 = vmatpush1.msra.mxu0 0.0
        %498 = vmatprep.mubr.f32.mxu0 0.0
        %499 = vmatmul.mubr.f32.gmra.mrb[0].mxu0 %v432
        %v500 = vpop.f32.mrb[0].mxu0
        %v501 = vadd.f32 0.0, %v500
        %v502 = vpop.f32.mrb[0].mxu0
        %v503 = vadd.f32 0.0, %v502
        %504 = vdwg.mxu0
        %v505 = vmul.f32 %v501, %v501
        %v506 = vmul.f32 %v503, %v503
        %v507 = vld [vmem:[#allocation5] sm:$0xff]
        %v508 = vld [vmem:[#allocation5 + $0x8] sm:$0xff]
        %v509 = vld [vmem:[#allocation5 + $0x10] sm:$0xff]
        %v510 = vld [vmem:[#allocation5 + $0x18] sm:$0xff]
        %v511 = vld [vmem:[#allocation5 + $0x20] sm:$0xff]
        %v512 = vld [vmem:[#allocation5 + $0x28] sm:$0xff]
        %v513 = vld [vmem:[#allocation5 + $0x30] sm:$0xff]
        %v514 = vld [vmem:[#allocation5 + $0x38] sm:$0xff]
        %v515 = vld [vmem:[#allocation5 + $0x40] sm:$0xff]
        %v516 = vld [vmem:[#allocation5 + $0x48] sm:$0xff]
        %v517 = vld [vmem:[#allocation5 + $0x50] sm:$0xff]
        %v518 = vld [vmem:[#allocation5 + $0x58] sm:$0xff]
        %v519 = vld [vmem:[#allocation5 + $0x60] sm:$0xff]
        %v520 = vld [vmem:[#allocation5 + $0x68] sm:$0xff]
        %v521 = vld [vmem:[#allocation5 + $0x70] sm:$0xff]
        %v522 = vld [vmem:[#allocation5 + $0x78] sm:$0xff]
        %v523 = vld [vmem:[#allocation5 + $0x80] sm:$0xff]
        %v524 = vld [vmem:[#allocation5 + $0x88] sm:$0xff]
        %v525 = vld [vmem:[#allocation5 + $0x90] sm:$0xff]
        %v526 = vld [vmem:[#allocation5 + $0x98] sm:$0xff]
        %v527 = vld [vmem:[#allocation5 + $0xa0] sm:$0xff]
        %v528 = vld [vmem:[#allocation5 + $0xa8] sm:$0xff]
        %v529 = vld [vmem:[#allocation5 + $0xb0] sm:$0xff]
        %v530 = vld [vmem:[#allocation5 + $0xb8] sm:$0xff]
        %v531 = vld [vmem:[#allocation5 + $0xc0] sm:$0xff]
        %v532 = vld [vmem:[#allocation5 + $0xc8] sm:$0xff]
        %v533 = vld [vmem:[#allocation5 + $0xd0] sm:$0xff]
        %v534 = vld [vmem:[#allocation5 + $0xd8] sm:$0xff]
        %v535 = vld [vmem:[#allocation5 + $0xe0] sm:$0xff]
        %v536 = vld [vmem:[#allocation5 + $0xe8] sm:$0xff]
        %v537 = vld [vmem:[#allocation5 + $0xf0] sm:$0xff]
        %v538 = vld [vmem:[#allocation5 + $0xf8] sm:$0xff]
        %v539 = vld [vmem:[#allocation5 + $0x100] sm:$0xff]
        %v540 = vld [vmem:[#allocation5 + $0x108] sm:$0xff]
        %v541 = vld [vmem:[#allocation5 + $0x110] sm:$0xff]
        %v542 = vld [vmem:[#allocation5 + $0x118] sm:$0xff]
        %v543 = vld [vmem:[#allocation5 + $0x120] sm:$0xff]
        %v544 = vld [vmem:[#allocation5 + $0x128] sm:$0xff]
        %v545 = vld [vmem:[#allocation5 + $0x130] sm:$0xff]
        %v546 = vld [vmem:[#allocation5 + $0x138] sm:$0xff]
        %v547 = vld [vmem:[#allocation5 + $0x140] sm:$0xff]
        %v548 = vld [vmem:[#allocation5 + $0x148] sm:$0xff]
        %v549 = vld [vmem:[#allocation5 + $0x150] sm:$0xff]
        %v550 = vld [vmem:[#allocation5 + $0x158] sm:$0xff]
        %v551 = vld [vmem:[#allocation5 + $0x160] sm:$0xff]
        %v552 = vld [vmem:[#allocation5 + $0x168] sm:$0xff]
        %v553 = vld [vmem:[#allocation5 + $0x170] sm:$0xff]
        %v554 = vld [vmem:[#allocation5 + $0x178] sm:$0xff]
        %v555 = vld [vmem:[#allocation5 + $0x180] sm:$0xff]
        %v556 = vld [vmem:[#allocation5 + $0x188] sm:$0xff]
        %v557 = vld [vmem:[#allocation5 + $0x190] sm:$0xff]
        %v558 = vld [vmem:[#allocation5 + $0x198] sm:$0xff]
        %v559 = vld [vmem:[#allocation5 + $0x1a0] sm:$0xff]
        %v560 = vld [vmem:[#allocation5 + $0x1a8] sm:$0xff]
        %v561 = vld [vmem:[#allocation5 + $0x1b0] sm:$0xff]
        %v562 = vld [vmem:[#allocation5 + $0x1b8] sm:$0xff]
        %v563 = vld [vmem:[#allocation5 + $0x1c0] sm:$0xff]
        %v564 = vld [vmem:[#allocation5 + $0x1c8] sm:$0xff]
        %v565 = vld [vmem:[#allocation5 + $0x1d0] sm:$0xff]
        %v566 = vld [vmem:[#allocation5 + $0x1d8] sm:$0xff]
        %v567 = vld [vmem:[#allocation5 + $0x1e0] sm:$0xff]
        %v568 = vld [vmem:[#allocation5 + $0x1e8] sm:$0xff]
        %v569 = vld [vmem:[#allocation5 + $0x1f0] sm:$0xff]
        %v570 = vld [vmem:[#allocation5 + $0x1f8] sm:$0xff]
        %571 = vmatprep.subr.mxu0 %v508
        %572 = vmatpush1.msra.mxu0 %v507
        %573 = vmatprep.subr.mxu0 %v510
        %574 = vmatpush1.msra.mxu0 %v509
        %575 = vmatprep.subr.mxu0 %v512
        %576 = vmatpush1.msra.mxu0 %v511
        %577 = vmatprep.subr.mxu0 %v514
        %578 = vmatpush1.msra.mxu0 %v513
        %579 = vmatprep.subr.mxu0 %v516
        %580 = vmatpush1.msra.mxu0 %v515
        %581 = vmatprep.subr.mxu0 %v518
        %582 = vmatpush1.msra.mxu0 %v517
        %583 = vmatprep.subr.mxu0 %v520
        %584 = vmatpush1.msra.mxu0 %v519
        %585 = vmatprep.subr.mxu0 %v522
        %586 = vmatpush1.msra.mxu0 %v521
        %587 = vmatprep.subr.mxu0 %v524
        %588 = vmatpush1.msra.mxu0 %v523
        %589 = vmatprep.subr.mxu0 %v526
        %590 = vmatpush1.msra.mxu0 %v525
        %591 = vmatprep.subr.mxu0 %v528
        %592 = vmatpush1.msra.mxu0 %v527
        %593 = vmatprep.subr.mxu0 %v530
        %594 = vmatpush1.msra.mxu0 %v529
        %595 = vmatprep.subr.mxu0 %v532
        %596 = vmatpush1.msra.mxu0 %v531
        %597 = vmatprep.subr.mxu0 %v534
        %598 = vmatpush1.msra.mxu0 %v533
        %599 = vmatprep.subr.mxu0 %v536
        %600 = vmatpush1.msra.mxu0 %v535
        %601 = vmatprep.subr.mxu0 %v538
        %602 = vmatpush1.msra.mxu0 %v537
        %603 = vmatprep.subr.mxu0 %v540
        %604 = vmatpush1.msra.mxu0 %v539
        %605 = vmatprep.subr.mxu0 %v542
        %606 = vmatpush1.msra.mxu0 %v541
        %607 = vmatprep.subr.mxu0 %v544
        %608 = vmatpush1.msra.mxu0 %v543
        %609 = vmatprep.subr.mxu0 %v546
        %610 = vmatpush1.msra.mxu0 %v545
        %611 = vmatprep.subr.mxu0 %v548
        %612 = vmatpush1.msra.mxu0 %v547
        %613 = vmatprep.subr.mxu0 %v550
        %614 = vmatpush1.msra.mxu0 %v549
        %615 = vmatprep.subr.mxu0 %v552
        %616 = vmatpush1.msra.mxu0 %v551
        %617 = vmatprep.subr.mxu0 %v554
        %618 = vmatpush1.msra.mxu0 %v553
        %619 = vmatprep.subr.mxu0 %v556
        %620 = vmatpush1.msra.mxu0 %v555
        %621 = vmatprep.subr.mxu0 %v558
        %622 = vmatpush1.msra.mxu0 %v557
        %623 = vmatprep.subr.mxu0 %v560
        %624 = vmatpush1.msra.mxu0 %v559
        %625 = vmatprep.subr.mxu0 %v562
        %626 = vmatpush1.msra.mxu0 %v561
        %627 = vmatprep.subr.mxu0 %v564
        %628 = vmatpush1.msra.mxu0 %v563
        %629 = vmatprep.subr.mxu0 %v566
        %630 = vmatpush1.msra.mxu0 %v565
        %631 = vmatprep.subr.mxu0 %v568
        %632 = vmatpush1.msra.mxu0 %v567
        %633 = vmatprep.subr.mxu0 %v570
        %634 = vmatpush1.msra.mxu0 %v569
        %635 = vmatprep.mubr.f32.mxu0 %v506
        %636 = vmatmul.mubr.f32.gmra.mrb[0].mxu0 %v505
        %v637 = vpop.f32.mrb[0].mxu0
        %v638 = vadd.f32 0.0, %v637
        %v639 = vpop.f32.mrb[0].mxu0
        %v640 = vadd.f32 0.0, %v639
        %641 = vdwg.mxu0
        %v642 = vmul.f32 %v638, 0.03125
        %v643 = vmul.f32 %v640, 0.03125
        %v644 = vadd.f32 %v642, 1e-06
        %v645 = vadd.f32 %v643, 1e-06
        %v646 = vrsqrt.pop %v644
        %v647 = vrsqrt.pop %v645
        %v648 = vmul.f32 %v501, %v646
        %v649 = vmul.f32 %v503, %v647
        %v650 = vld [vmem:[%s3] sm:$0x3]
        %v652 = vlaneseq
        %v653 = vshrl.u32 %v652, 7
        %v654 = vsub.s32 0, %v653
        %v655 = vrot.slane %v650, %v654
        %v656 = vlaneseq
        %v657 = vshrl.u32 %v656, 7
        %v658 = vsub.s32 1, %v657
        %v659 = vrot.slane %v650, %v658
        %v662 = vmul.f32 %v648, %v655
        %v663 = vmul.f32 %v649, %v659
        %v664 = vld [vmem:[#allocation2] sm:$0xff]
        %v665 = vld [vmem:[#allocation2 + $0x8] sm:$0xff]
        %v666 = vld [vmem:[#allocation2 + $0x10] sm:$0xff]
        %v667 = vld [vmem:[#allocation2 + $0x18] sm:$0xff]
        %v668 = vld [vmem:[#allocation2 + $0x20] sm:$0xff]
        %v669 = vld [vmem:[#allocation2 + $0x28] sm:$0xff]
        %v670 = vld [vmem:[#allocation2 + $0x30] sm:$0xff]
        %v671 = vld [vmem:[#allocation2 + $0x38] sm:$0xff]
        %v672 = vld [vmem:[#allocation2 + $0x40] sm:$0xff]
        %v673 = vld [vmem:[#allocation2 + $0x48] sm:$0xff]
        %v674 = vld [vmem:[#allocation2 + $0x50] sm:$0xff]
        %v675 = vld [vmem:[#allocation2 + $0x58] sm:$0xff]
        %v676 = vld [vmem:[#allocation2 + $0x60] sm:$0xff]
        %v677 = vld [vmem:[#allocation2 + $0x68] sm:$0xff]
        %v678 = vld [vmem:[#allocation2 + $0x70] sm:$0xff]
        %v679 = vld [vmem:[#allocation2 + $0x78] sm:$0xff]
        %v680 = vld [vmem:[#allocation2 + $0x80] sm:$0xff]
        %v681 = vld [vmem:[#allocation2 + $0x88] sm:$0xff]
        %v682 = vld [vmem:[#allocation2 + $0x90] sm:$0xff]
        %v683 = vld [vmem:[#allocation2 + $0x98] sm:$0xff]
        %v684 = vld [vmem:[#allocation2 + $0xa0] sm:$0xff]
        %v685 = vld [vmem:[#allocation2 + $0xa8] sm:$0xff]
        %v686 = vld [vmem:[#allocation2 + $0xb0] sm:$0xff]
        %v687 = vld [vmem:[#allocation2 + $0xb8] sm:$0xff]
        %v688 = vld [vmem:[#allocation2 + $0xc0] sm:$0xff]
        %v689 = vld [vmem:[#allocation2 + $0xc8] sm:$0xff]
        %v690 = vld [vmem:[#allocation2 + $0xd0] sm:$0xff]
        %v691 = vld [vmem:[#allocation2 + $0xd8] sm:$0xff]
        %v692 = vld [vmem:[#allocation2 + $0xe0] sm:$0xff]
        %v693 = vld [vmem:[#allocation2 + $0xe8] sm:$0xff]
        %v694 = vld [vmem:[#allocation2 + $0xf0] sm:$0xff]
        %v695 = vld [vmem:[#allocation2 + $0xf8] sm:$0xff]
        %v696 = vld [vmem:[#allocation2 + $0x100] sm:$0xff]
        %v697 = vld [vmem:[#allocation2 + $0x108] sm:$0xff]
        %v698 = vld [vmem:[#allocation2 + $0x110] sm:$0xff]
        %v699 = vld [vmem:[#allocation2 + $0x118] sm:$0xff]
        %v700 = vld [vmem:[#allocation2 + $0x120] sm:$0xff]
        %v701 = vld [vmem:[#allocation2 + $0x128] sm:$0xff]
        %v702 = vld [vmem:[#allocation2 + $0x130] sm:$0xff]
        %v703 = vld [vmem:[#allocation2 + $0x138] sm:$0xff]
        %v704 = vld [vmem:[#allocation2 + $0x140] sm:$0xff]
        %v705 = vld [vmem:[#allocation2 + $0x148] sm:$0xff]
        %v706 = vld [vmem:[#allocation2 + $0x150] sm:$0xff]
        %v707 = vld [vmem:[#allocation2 + $0x158] sm:$0xff]
        %v708 = vld [vmem:[#allocation2 + $0x160] sm:$0xff]
        %v709 = vld [vmem:[#allocation2 + $0x168] sm:$0xff]
        %v710 = vld [vmem:[#allocation2 + $0x170] sm:$0xff]
        %v711 = vld [vmem:[#allocation2 + $0x178] sm:$0xff]
        %v712 = vld [vmem:[#allocation2 + $0x180] sm:$0xff]
        %v713 = vld [vmem:[#allocation2 + $0x188] sm:$0xff]
        %v714 = vld [vmem:[#allocation2 + $0x190] sm:$0xff]
        %v715 = vld [vmem:[#allocation2 + $0x198] sm:$0xff]
        %v716 = vld [vmem:[#allocation2 + $0x1a0] sm:$0xff]
        %v717 = vld [vmem:[#allocation2 + $0x1a8] sm:$0xff]
        %v718 = vld [vmem:[#allocation2 + $0x1b0] sm:$0xff]
        %v719 = vld [vmem:[#allocation2 + $0x1b8] sm:$0xff]
        %v720 = vld [vmem:[#allocation2 + $0x1c0] sm:$0xff]
        %v721 = vld [vmem:[#allocation2 + $0x1c8] sm:$0xff]
        %v722 = vld [vmem:[#allocation2 + $0x1d0] sm:$0xff]
        %v723 = vld [vmem:[#allocation2 + $0x1d8] sm:$0xff]
        %v724 = vld [vmem:[#allocation2 + $0x1e0] sm:$0xff]
        %v725 = vld [vmem:[#allocation2 + $0x1e8] sm:$0xff]
        %v726 = vld [vmem:[#allocation2 + $0x1f0] sm:$0xff]
        %v727 = vld [vmem:[#allocation2 + $0x1f8] sm:$0xff]
        %728 = vmatprep.subr.mxu0 %v665
        %729 = vmatpush1.msra.mxu0 %v664
        %730 = vmatprep.subr.mxu0 %v667
        %731 = vmatpush1.msra.mxu0 %v666
        %732 = vmatprep.subr.mxu0 %v669
        %733 = vmatpush1.msra.mxu0 %v668
        %734 = vmatprep.subr.mxu0 %v671
        %735 = vmatpush1.msra.mxu0 %v670
        %736 = vmatprep.subr.mxu0 %v673
        %737 = vmatpush1.msra.mxu0 %v672
        %738 = vmatprep.subr.mxu0 %v675
        %739 = vmatpush1.msra.mxu0 %v674
        %740 = vmatprep.subr.mxu0 %v677
        %741 = vmatpush1.msra.mxu0 %v676
        %742 = vmatprep.subr.mxu0 %v679
        %743 = vmatpush1.msra.mxu0 %v678
        %744 = vmatprep.subr.mxu0 %v681
        %745 = vmatpush1.msra.mxu0 %v680
        %746 = vmatprep.subr.mxu0 %v683
        %747 = vmatpush1.msra.mxu0 %v682
        %748 = vmatprep.subr.mxu0 %v685
        %749 = vmatpush1.msra.mxu0 %v684
        %750 = vmatprep.subr.mxu0 %v687
        %751 = vmatpush1.msra.mxu0 %v686
        %752 = vmatprep.subr.mxu0 %v689
        %753 = vmatpush1.msra.mxu0 %v688
        %754 = vmatprep.subr.mxu0 %v691
        %755 = vmatpush1.msra.mxu0 %v690
        %756 = vmatprep.subr.mxu0 %v693
        %757 = vmatpush1.msra.mxu0 %v692
        %758 = vmatprep.subr.mxu0 %v695
        %759 = vmatpush1.msra.mxu0 %v694
        %760 = vmatprep.subr.mxu0 %v697
        %761 = vmatpush1.msra.mxu0 %v696
        %762 = vmatprep.subr.mxu0 %v699
        %763 = vmatpush1.msra.mxu0 %v698
        %764 = vmatprep.subr.mxu0 %v701
        %765 = vmatpush1.msra.mxu0 %v700
        %766 = vmatprep.subr.mxu0 %v703
        %767 = vmatpush1.msra.mxu0 %v702
        %768 = vmatprep.subr.mxu0 %v705
        %769 = vmatpush1.msra.mxu0 %v704
        %770 = vmatprep.subr.mxu0 %v707
        %771 = vmatpush1.msra.mxu0 %v706
        %772 = vmatprep.subr.mxu0 %v709
        %773 = vmatpush1.msra.mxu0 %v708
        %774 = vmatprep.subr.mxu0 %v711
        %775 = vmatpush1.msra.mxu0 %v710
        %776 = vmatprep.subr.mxu0 %v713
        %777 = vmatpush1.msra.mxu0 %v712
        %778 = vmatprep.subr.mxu0 %v715
        %779 = vmatpush1.msra.mxu0 %v714
        %780 = vmatprep.subr.mxu0 %v717
        %781 = vmatpush1.msra.mxu0 %v716
        %782 = vmatprep.subr.mxu0 %v719
        %783 = vmatpush1.msra.mxu0 %v718
        %784 = vmatprep.subr.mxu0 %v721
        %785 = vmatpush1.msra.mxu0 %v720
        %786 = vmatprep.subr.mxu0 %v723
        %787 = vmatpush1.msra.mxu0 %v722
        %788 = vmatprep.subr.mxu0 %v725
        %789 = vmatpush1.msra.mxu0 %v724
        %790 = vmatprep.subr.mxu0 %v727
        %791 = vmatpush1.msra.mxu0 %v726
        %792 = vmatprep.mubr.f32.mxu0 %v663
        %793 = vmatmul.mubr.f32.gmra.mrb[0].mxu0 %v662
        %v794 = vpop.f32.mrb[0].mxu0
        %v795 = vadd.f32 0.0, %v794
        %v796 = vpop.f32.mrb[0].mxu0
        %v797 = vadd.f32 0.0, %v796
        %798 = vdwg.mxu0
        %v799 = vld [vmem:[%s4] sm:$0xff]
        %v800 = vld [vmem:[%s4 + $0x8] sm:$0xff]
        %v801 = vmul.f32 %v662, %v799
        %v802 = vmul.f32 %v663, %v800
        %v803 = vld [vmem:[%s5] sm:$0xff]
        %v804 = vld [vmem:[%s5 + $0x8] sm:$0xff]
        %v805 = vmul.f32 %v795, %v803
        %v806 = vmul.f32 %v797, %v804
        %v807 = vadd.f32 %v801, %v805
        %v808 = vadd.f32 %v802, %v806
        %v809 = vmul.f32 %v807, 0.17677669
        %v810 = vld [vmem:[%s412] sm:$0xff]
        %v811 = vld [vmem:[%s2] sm:$0xff]
        %v812 = vld [vmem:[%s2 + $0x8] sm:$0xff]
        %v813 = vld [vmem:[%s2 + $0x10] sm:$0xff]
        %v814 = vld [vmem:[%s2 + $0x18] sm:$0xff]
        %v815 = vld [vmem:[%s2 + $0x20] sm:$0xff]
        %v816 = vld [vmem:[%s2 + $0x28] sm:$0xff]
        %v817 = vld [vmem:[%s2 + $0x30] sm:$0xff]
        %v818 = vld [vmem:[%s2 + $0x38] sm:$0xff]
        %v819 = vld [vmem:[%s2 + $0x40] sm:$0xff]
        %v820 = vld [vmem:[%s2 + $0x48] sm:$0xff]
        %v821 = vld [vmem:[%s2 + $0x50] sm:$0xff]
        %v822 = vld [vmem:[%s2 + $0x58] sm:$0xff]
        %v823 = vld [vmem:[%s2 + $0x60] sm:$0xff]
        %v824 = vld [vmem:[%s2 + $0x68] sm:$0xff]
        %v825 = vld [vmem:[%s2 + $0x70] sm:$0xff]
        %v826 = vld [vmem:[%s2 + $0x78] sm:$0xff]
        %vm827 = vcmask 261120
        %v829 = vsel %vm827, %v809, 0
        %v832 = vsel %vm827, %v808, 0
        %834 = vmatprep.subr.mxu0 0.0
        %835 = vmatpush1.xpose.msra.mxu0 %v832
        %836 = vmatprep.subr.mxu0 0.0
        %837 = vmatpush1.xpose.msra.mxu0 0.0
        %838 = vmatprep.subr.mxu0 0.0
        %839 = vmatpush1.xpose.msra.mxu0 0.0
        %840 = vmatprep.subr.mxu0 0.0
        %841 = vmatpush1.xpose.msra.mxu0 0.0
        %842 = vmatprep.subr.mxu0 0.0
        %843 = vmatpush1.xpose.msra.mxu0 0.0
        %844 = vmatprep.subr.mxu0 0.0
        %845 = vmatpush1.xpose.msra.mxu0 0.0
        %846 = vmatprep.subr.mxu0 0.0
        %847 = vmatpush1.xpose.msra.mxu0 0.0
        %848 = vmatprep.subr.mxu0 0.0
        %849 = vmatpush1.xpose.msra.mxu0 0.0
        %850 = vmatprep.subr.mxu0 0.0
        %851 = vmatpush1.xpose.msra.mxu0 0.0
        %852 = vmatprep.subr.mxu0 0.0
        %853 = vmatpush1.xpose.msra.mxu0 0.0
        %854 = vmatprep.subr.mxu0 0.0
        %855 = vmatpush1.xpose.msra.mxu0 0.0
        %856 = vmatprep.subr.mxu0 0.0
        %857 = vmatpush1.xpose.msra.mxu0 0.0
        %858 = vmatprep.subr.mxu0 0.0
        %859 = vmatpush1.xpose.msra.mxu0 0.0
        %860 = vmatprep.subr.mxu0 0.0
        %861 = vmatpush1.xpose.msra.mxu0 0.0
        %862 = vmatprep.subr.mxu0 0.0
        %863 = vmatpush1.xpose.msra.mxu0 0.0
        %864 = vmatprep.subr.mxu0 0.0
        %865 = vmatpush1.xpose.msra.mxu0 0.0
        %866 = vmatprep.subr.mxu0 0.0
        %867 = vmatpush1.xpose.msra.mxu0 0.0
        %868 = vmatprep.subr.mxu0 0.0
        %869 = vmatpush1.xpose.msra.mxu0 0.0
        %870 = vmatprep.subr.mxu0 0.0
        %871 = vmatpush1.xpose.msra.mxu0 0.0
        %872 = vmatprep.subr.mxu0 0.0
        %873 = vmatpush1.xpose.msra.mxu0 0.0
        %874 = vmatprep.subr.mxu0 0.0
        %875 = vmatpush1.xpose.msra.mxu0 0.0
        %876 = vmatprep.subr.mxu0 0.0
        %877 = vmatpush1.xpose.msra.mxu0 0.0
        %878 = vmatprep.subr.mxu0 0.0
        %879 = vmatpush1.xpose.msra.mxu0 0.0
        %880 = vmatprep.subr.mxu0 0.0
        %881 = vmatpush1.xpose.msra.mxu0 0.0
        %882 = vmatprep.subr.mxu0 0.0
        %883 = vmatpush1.xpose.msra.mxu0 0.0
        %884 = vmatprep.subr.mxu0 0.0
        %885 = vmatpush1.xpose.msra.mxu0 0.0
        %886 = vmatprep.subr.mxu0 0.0
        %887 = vmatpush1.xpose.msra.mxu0 0.0
        %888 = vmatprep.subr.mxu0 0.0
        %889 = vmatpush1.xpose.msra.mxu0 0.0
        %890 = vmatprep.subr.mxu0 0.0
        %891 = vmatpush1.xpose.msra.mxu0 0.0
        %892 = vmatprep.subr.mxu0 0.0
        %893 = vmatpush1.xpose.msra.mxu0 0.0
        %894 = vmatprep.subr.mxu0 0.0
        %895 = vmatpush1.xpose.msra.mxu0 0.0
        %896 = vmatprep.subr.mxu0 0.0
        %897 = vmatpush1.xpose.msra.mxu0 0.0
        %898 = vmatprep.mubr.f32.mxu0 0.0
        %899 = vmatmul.mubr.f32.gmra.mrb[0].mxu0 %v829
        %v900 = vpop.f32.mrb[0].mxu0
        %v901 = vadd.f32 %v810, %v900
        %v902 = vpop.f32.mrb[0].mxu0
        %903 = vdwg.mxu0
        %vm904 = vcmask 64512
        %v905 = vsel %vm904, %v901, -inf
        %906 = vmax.xlane.f32.xlu0 %v905
        %v907 = vpop.xlane.xlu0 %906
        %v908 = vsub.f32 %v901, %v907
        %v909 = vmul.f32 %v908, 1.442695
        %v910 = vpow.pop %v909
        %v911 = vsel %vm904, %v910, 0.0
        %912 = vadd.xlane.f32.xlu0 %v911
        %v913 = vpop.xlane.xlu0 %912
        %v914 = vrcp.pop %v913
        %v915 = vmul.f32 %v910, %v914
        %916 = vst.msk [vmem:[%s404] sm:$0xff] %vm904, %v915
        %918 = vrot.lane.b32.xlu0 %v503, 64
        %v919 = vpop.permute.xlu0 %918
        %v922 = vsel %vm904, %v915, 0
        %924 = vmatprep.subr.mxu0 0.0
        %925 = vmatpush1.msra.mxu0 %v919
        %926 = vmatprep.subr.mxu0 0.0
        %927 = vmatpush1.msra.mxu0 0.0
        %928 = vmatprep.subr.mxu0 0.0
        %929 = vmatpush1.msra.mxu0 0.0
        %930 = vmatprep.subr.mxu0 0.0
        %931 = vmatpush1.msra.mxu0 0.0
        %932 = vmatprep.subr.mxu0 0.0
        %933 = vmatpush1.msra.mxu0 0.0
        %934 = vmatprep.subr.mxu0 0.0
        %935 = vmatpush1.msra.mxu0 0.0
        %936 = vmatprep.subr.mxu0 0.0
        %937 = vmatpush1.msra.mxu0 0.0
        %938 = vmatprep.subr.mxu0 0.0
        %939 = vmatpush1.msra.mxu0 0.0
        %940 = vmatprep.subr.mxu0 0.0
        %941 = vmatpush1.msra.mxu0 0.0
        %942 = vmatprep.subr.mxu0 0.0
        %943 = vmatpush1.msra.mxu0 0.0
        %944 = vmatprep.subr.mxu0 0.0
        %945 = vmatpush1.msra.mxu0 0.0
        %946 = vmatprep.subr.mxu0 0.0
        %947 = vmatpush1.msra.mxu0 0.0
        %948 = vmatprep.subr.mxu0 0.0
        %949 = vmatpush1.msra.mxu0 0.0
        %950 = vmatprep.subr.mxu0 0.0
        %951 = vmatpush1.msra.mxu0 0.0
        %952 = vmatprep.subr.mxu0 0.0
        %953 = vmatpush1.msra.mxu0 0.0
        %954 = vmatprep.subr.mxu0 0.0
        %955 = vmatpush1.msra.mxu0 0.0
        %956 = vmatprep.subr.mxu0 0.0
        %957 = vmatpush1.msra.mxu0 0.0
        %958 = vmatprep.subr.mxu0 0.0
        %959 = vmatpush1.msra.mxu0 0.0
        %960 = vmatprep.subr.mxu0 0.0
        %961 = vmatpush1.msra.mxu0 0.0
        %962 = vmatprep.subr.mxu0 0.0
        %963 = vmatpush1.msra.mxu0 0.0
        %964 = vmatprep.subr.mxu0 0.0
        %965 = vmatpush1.msra.mxu0 0.0
        %966 = vmatprep.subr.mxu0 0.0
        %967 = vmatpush1.msra.mxu0 0.0
        %968 = vmatprep.subr.mxu0 0.0
        %969 = vmatpush1.msra.mxu0 0.0
        %970 = vmatprep.subr.mxu0 0.0
        %971 = vmatpush1.msra.mxu0 0.0
        %972 = vmatprep.subr.mxu0 0.0
        %973 = vmatpush1.msra.mxu0 0.0
        %974 = vmatprep.subr.mxu0 0.0
        %975 = vmatpush1.msra.mxu0 0.0
        %976 = vmatprep.subr.mxu0 0.0
        %977 = vmatpush1.msra.mxu0 0.0
        %978 = vmatprep.subr.mxu0 0.0
        %979 = vmatpush1.msra.mxu0 0.0
        %980 = vmatprep.subr.mxu0 0.0
        %981 = vmatpush1.msra.mxu0 0.0
        %982 = vmatprep.subr.mxu0 0.0
        %983 = vmatpush1.msra.mxu0 0.0
        %984 = vmatprep.subr.mxu0 0.0
        %985 = vmatpush1.msra.mxu0 0.0
        %986 = vmatprep.subr.mxu0 0.0
        %987 = vmatpush1.msra.mxu0 0.0
        %988 = vmatprep.mubr.f32.mxu0 0.0
        %989 = vmatmul.mubr.f32.gmra.mrb[0].mxu0 %v922
        %v990 = vpop.f32.mrb[0].mxu0
        %v991 = vadd.f32 0.0, %v990
        %v992 = vpop.f32.mrb[0].mxu0
        %993 = vdwg.mxu0
        %994 = vrot.lane.b32.xlu0 %v809, 96
        %v995 = vpop.permute.xlu0 %994
        %v996 = vsel %vm827, %v995, 0
        %998 = vmatprep.subr.mxu0 0.0
        %999 = vmatpush1.xpose.msra.mxu0 %v832
        %1000 = vmatprep.subr.mxu0 0.0
        %1001 = vmatpush1.xpose.msra.mxu0 0.0
        %1002 = vmatprep.subr.mxu0 0.0
        %1003 = vmatpush1.xpose.msra.mxu0 0.0
        %1004 = vmatprep.subr.mxu0 0.0
        %1005 = vmatpush1.xpose.msra.mxu0 0.0
        %1006 = vmatprep.subr.mxu0 0.0
        %1007 = vmatpush1.xpose.msra.mxu0 0.0
        %1008 = vmatprep.subr.mxu0 0.0
        %1009 = vmatpush1.xpose.msra.mxu0 0.0
        %1010 = vmatprep.subr.mxu0 0.0
        %1011 = vmatpush1.xpose.msra.mxu0 0.0
        %1012 = vmatprep.subr.mxu0 0.0
        %1013 = vmatpush1.xpose.msra.mxu0 0.0
        %1014 = vmatprep.subr.mxu0 0.0
        %1015 = vmatpush1.xpose.msra.mxu0 0.0
        %1016 = vmatprep.subr.mxu0 0.0
        %1017 = vmatpush1.xpose.msra.mxu0 0.0
        %1018 = vmatprep.subr.mxu0 0.0
        %1019 = vmatpush1.xpose.msra.mxu0 0.0
        %1020 = vmatprep.subr.mxu0 0.0
        %1021 = vmatpush1.xpose.msra.mxu0 0.0
        %1022 = vmatprep.subr.mxu0 0.0
        %1023 = vmatpush1.xpose.msra.mxu0 0.0
        %1024 = vmatprep.subr.mxu0 0.0
        %1025 = vmatpush1.xpose.msra.mxu0 0.0
        %1026 = vmatprep.subr.mxu0 0.0
        %1027 = vmatpush1.xpose.msra.mxu0 0.0
        %1028 = vmatprep.subr.mxu0 0.0
        %1029 = vmatpush1.xpose.msra.mxu0 0.0
        %1030 = vmatprep.subr.mxu0 0.0
        %1031 = vmatpush1.xpose.msra.mxu0 0.0
        %1032 = vmatprep.subr.mxu0 0.0
        %1033 = vmatpush1.xpose.msra.mxu0 0.0
        %1034 = vmatprep.subr.mxu0 0.0
        %1035 = vmatpush1.xpose.msra.mxu0 0.0
        %1036 = vmatprep.subr.mxu0 0.0
        %1037 = vmatpush1.xpose.msra.mxu0 0.0
        %1038 = vmatprep.subr.mxu0 0.0
        %1039 = vmatpush1.xpose.msra.mxu0 0.0
        %1040 = vmatprep.subr.mxu0 0.0
        %1041 = vmatpush1.xpose.msra.mxu0 0.0
        %1042 = vmatprep.subr.mxu0 0.0
        %1043 = vmatpush1.xpose.msra.mxu0 0.0
        %1044 = vmatprep.subr.mxu0 0.0
        %1045 = vmatpush1.xpose.msra.mxu0 0.0
        %1046 = vmatprep.subr.mxu0 0.0
        %1047 = vmatpush1.xpose.msra.mxu0 0.0
        %1048 = vmatprep.subr.mxu0 0.0
        %1049 = vmatpush1.xpose.msra.mxu0 0.0
        %1050 = vmatprep.subr.mxu0 0.0
        %1051 = vmatpush1.xpose.msra.mxu0 0.0
        %1052 = vmatprep.subr.mxu0 0.0
        %1053 = vmatpush1.xpose.msra.mxu0 0.0
        %1054 = vmatprep.subr.mxu0 0.0
        %1055 = vmatpush1.xpose.msra.mxu0 0.0
        %1056 = vmatprep.subr.mxu0 0.0
        %1057 = vmatpush1.xpose.msra.mxu0 0.0
        %1058 = vmatprep.subr.mxu0 0.0
        %1059 = vmatpush1.xpose.msra.mxu0 0.0
        %1060 = vmatprep.subr.mxu0 0.0
        %1061 = vmatpush1.xpose.msra.mxu0 0.0
        %1062 = vmatprep.mubr.f32.mxu0 0.0
        %1063 = vmatmul.mubr.f32.gmra.mrb[0].mxu0 %v996
        %v1064 = vpop.f32.mrb[0].mxu0
        %v1065 = vadd.f32 %v810, %v1064
        %v1066 = vpop.f32.mrb[0].mxu0
        %1067 = vdwg.mxu0
        %v1068 = vsel %vm904, %v1065, -inf
        %1069 = vmax.xlane.f32.xlu0 %v1068
        %v1070 = vpop.xlane.xlu0 %1069
        %v1071 = vsub.f32 %v1065, %v1070
        %v1072 = vmul.f32 %v1071, 1.442695
        %v1073 = vpow.pop %v1072
        %v1074 = vsel %vm904, %v1073, 0.0
        %1075 = vadd.xlane.f32.xlu0 %v1074
        %v1076 = vpop.xlane.xlu0 %1075
        %v1077 = vrcp.pop %v1076
        %v1078 = vmul.f32 %v1073, %v1077
        %s1079 = scalar_lea.vmem %s404, 8 [#allocation8]
        %1080 = vst.msk [vmem:[%s1079] sm:$0xff] %vm904, %v1078
        %v1082 = vsel %vm904, %v1078, 0
        %1084 = vmatprep.subr.mxu0 0.0
        %1085 = vmatpush1.msra.mxu0 %v919
        %1086 = vmatprep.subr.mxu0 0.0
        %1087 = vmatpush1.msra.mxu0 0.0
        %1088 = vmatprep.subr.mxu0 0.0
        %1089 = vmatpush1.msra.mxu0 0.0
        %1090 = vmatprep.subr.mxu0 0.0
        %1091 = vmatpush1.msra.mxu0 0.0
        %1092 = vmatprep.subr.mxu0 0.0
        %1093 = vmatpush1.msra.mxu0 0.0
        %1094 = vmatprep.subr.mxu0 0.0
        %1095 = vmatpush1.msra.mxu0 0.0
        %1096 = vmatprep.subr.mxu0 0.0
        %1097 = vmatpush1.msra.mxu0 0.0
        %1098 = vmatprep.subr.mxu0 0.0
        %1099 = vmatpush1.msra.mxu0 0.0
        %1100 = vmatprep.subr.mxu0 0.0
        %1101 = vmatpush1.msra.mxu0 0.0
        %1102 = vmatprep.subr.mxu0 0.0
        %1103 = vmatpush1.msra.mxu0 0.0
        %1104 = vmatprep.subr.mxu0 0.0
        %1105 = vmatpush1.msra.mxu0 0.0
        %1106 = vmatprep.subr.mxu0 0.0
        %1107 = vmatpush1.msra.mxu0 0.0
        %1108 = vmatprep.subr.mxu0 0.0
        %1109 = vmatpush1.msra.mxu0 0.0
        %1110 = vmatprep.subr.mxu0 0.0
        %1111 = vmatpush1.msra.mxu0 0.0
        %1112 = vmatprep.subr.mxu0 0.0
        %1113 = vmatpush1.msra.mxu0 0.0
        %1114 = vmatprep.subr.mxu0 0.0
        %1115 = vmatpush1.msra.mxu0 0.0
        %1116 = vmatprep.subr.mxu0 0.0
        %1117 = vmatpush1.msra.mxu0 0.0
        %1118 = vmatprep.subr.mxu0 0.0
        %1119 = vmatpush1.msra.mxu0 0.0
        %1120 = vmatprep.subr.mxu0 0.0
        %1121 = vmatpush1.msra.mxu0 0.0
        %1122 = vmatprep.subr.mxu0 0.0
        %1123 = vmatpush1.msra.mxu0 0.0
        %1124 = vmatprep.subr.mxu0 0.0
        %1125 = vmatpush1.msra.mxu0 0.0
        %1126 = vmatprep.subr.mxu0 0.0
        %1127 = vmatpush1.msra.mxu0 0.0
        %1128 = vmatprep.subr.mxu0 0.0
        %1129 = vmatpush1.msra.mxu0 0.0
        %1130 = vmatprep.subr.mxu0 0.0
        %1131 = vmatpush1.msra.mxu0 0.0
        %1132 = vmatprep.subr.mxu0 0.0
        %1133 = vmatpush1.msra.mxu0 0.0
        %1134 = vmatprep.subr.mxu0 0.0
        %1135 = vmatpush1.msra.mxu0 0.0
        %1136 = vmatprep.subr.mxu0 0.0
        %1137 = vmatpush1.msra.mxu0 0.0
        %1138 = vmatprep.subr.mxu0 0.0
        %1139 = vmatpush1.msra.mxu0 0.0
        %1140 = vmatprep.subr.mxu0 0.0
        %1141 = vmatpush1.msra.mxu0 0.0
        %1142 = vmatprep.subr.mxu0 0.0
        %1143 = vmatpush1.msra.mxu0 0.0
        %1144 = vmatprep.subr.mxu0 0.0
        %1145 = vmatpush1.msra.mxu0 0.0
        %1146 = vmatprep.subr.mxu0 0.0
        %1147 = vmatpush1.msra.mxu0 0.0
        %1148 = vmatprep.mubr.f32.mxu0 0.0
        %1149 = vmatmul.mubr.f32.gmra.mrb[0].mxu0 %v1082
        %v1150 = vpop.f32.mrb[0].mxu0
        %v1151 = vadd.f32 0.0, %v1150
        %v1152 = vpop.f32.mrb[0].mxu0
        %1153 = vdwg.mxu0
        %v1155 = vsel %vm827, %v1151, 0
        %1157 = vmatprep.subr.mxu0 0.0
        %1158 = vmatpush1.msra.mxu0 %v815
        %1159 = vmatprep.subr.mxu0 0.0
        %1160 = vmatpush1.msra.mxu0 %v816
        %1161 = vmatprep.subr.mxu0 0.0
        %1162 = vmatpush1.msra.mxu0 %v817
        %1163 = vmatprep.subr.mxu0 0.0
        %1164 = vmatpush1.msra.mxu0 %v818
        %1165 = vmatprep.subr.mxu0 0.0
        %1166 = vmatpush1.msra.mxu0 0.0
        %1167 = vmatprep.subr.mxu0 0.0
        %1168 = vmatpush1.msra.mxu0 0.0
        %1169 = vmatprep.subr.mxu0 0.0
        %1170 = vmatpush1.msra.mxu0 0.0
        %1171 = vmatprep.subr.mxu0 0.0
        %1172 = vmatpush1.msra.mxu0 0.0
        %1173 = vmatprep.subr.mxu0 0.0
        %1174 = vmatpush1.msra.mxu0 0.0
        %1175 = vmatprep.subr.mxu0 0.0
        %1176 = vmatpush1.msra.mxu0 0.0
        %1177 = vmatprep.subr.mxu0 0.0
        %1178 = vmatpush1.msra.mxu0 0.0
        %1179 = vmatprep.subr.mxu0 0.0
        %1180 = vmatpush1.msra.mxu0 0.0
        %1181 = vmatprep.subr.mxu0 0.0
        %1182 = vmatpush1.msra.mxu0 0.0
        %1183 = vmatprep.subr.mxu0 0.0
        %1184 = vmatpush1.msra.mxu0 0.0
        %1185 = vmatprep.subr.mxu0 0.0
        %1186 = vmatpush1.msra.mxu0 0.0
        %1187 = vmatprep.subr.mxu0 0.0
        %1188 = vmatpush1.msra.mxu0 0.0
        %1189 = vmatprep.subr.mxu0 0.0
        %1190 = vmatpush1.msra.mxu0 0.0
        %1191 = vmatprep.subr.mxu0 0.0
        %1192 = vmatpush1.msra.mxu0 0.0
        %1193 = vmatprep.subr.mxu0 0.0
        %1194 = vmatpush1.msra.mxu0 0.0
        %1195 = vmatprep.subr.mxu0 0.0
        %1196 = vmatpush1.msra.mxu0 0.0
        %1197 = vmatprep.subr.mxu0 0.0
        %1198 = vmatpush1.msra.mxu0 0.0
        %1199 = vmatprep.subr.mxu0 0.0
        %1200 = vmatpush1.msra.mxu0 0.0
        %1201 = vmatprep.subr.mxu0 0.0
        %1202 = vmatpush1.msra.mxu0 0.0
        %1203 = vmatprep.subr.mxu0 0.0
        %1204 = vmatpush1.msra.mxu0 0.0
        %1205 = vmatprep.subr.mxu0 0.0
        %1206 = vmatpush1.msra.mxu0 0.0
        %1207 = vmatprep.subr.mxu0 0.0
        %1208 = vmatpush1.msra.mxu0 0.0
        %1209 = vmatprep.subr.mxu0 0.0
        %1210 = vmatpush1.msra.mxu0 0.0
        %1211 = vmatprep.subr.mxu0 0.0
        %1212 = vmatpush1.msra.mxu0 0.0
        %1213 = vmatprep.subr.mxu0 0.0
        %1214 = vmatpush1.msra.mxu0 0.0
        %1215 = vmatprep.subr.mxu0 0.0
        %1216 = vmatpush1.msra.mxu0 0.0
        %1217 = vmatprep.subr.mxu0 0.0
        %1218 = vmatpush1.msra.mxu0 0.0
        %1219 = vmatprep.subr.mxu0 0.0
        %1220 = vmatpush1.msra.mxu0 0.0
        %1221 = vmatprep.mubr.f32.mxu0 0.0
        %1222 = vmatmul.mubr.f32.gmra.mrb[0].mxu0 %v1155
        %v1223 = vpop.f32.mrb[0].mxu0
        %v1224 = vadd.f32 0.0, %v1223
        %v1225 = vpop.f32.mrb[0].mxu0
        %1226 = vdwg.mxu0
        %v1228 = vsel %vm827, %v991, 0
        %1230 = vmatprep.subr.mxu0 0.0
        %1231 = vmatpush1.msra.mxu0 %v811
        %1232 = vmatprep.subr.mxu0 0.0
        %1233 = vmatpush1.msra.mxu0 %v812
        %1234 = vmatprep.subr.mxu0 0.0
        %1235 = vmatpush1.msra.mxu0 %v813
        %1236 = vmatprep.subr.mxu0 0.0
        %1237 = vmatpush1.msra.mxu0 %v814
        %1238 = vmatprep.subr.mxu0 0.0
        %1239 = vmatpush1.msra.mxu0 0.0
        %1240 = vmatprep.subr.mxu0 0.0
        %1241 = vmatpush1.msra.mxu0 0.0
        %1242 = vmatprep.subr.mxu0 0.0
        %1243 = vmatpush1.msra.mxu0 0.0
        %1244 = vmatprep.subr.mxu0 0.0
        %1245 = vmatpush1.msra.mxu0 0.0
        %1246 = vmatprep.subr.mxu0 0.0
        %1247 = vmatpush1.msra.mxu0 0.0
        %1248 = vmatprep.subr.mxu0 0.0
        %1249 = vmatpush1.msra.mxu0 0.0
        %1250 = vmatprep.subr.mxu0 0.0
        %1251 = vmatpush1.msra.mxu0 0.0
        %1252 = vmatprep.subr.mxu0 0.0
        %1253 = vmatpush1.msra.mxu0 0.0
        %1254 = vmatprep.subr.mxu0 0.0
        %1255 = vmatpush1.msra.mxu0 0.0
        %1256 = vmatprep.subr.mxu0 0.0
        %1257 = vmatpush1.msra.mxu0 0.0
        %1258 = vmatprep.subr.mxu0 0.0
        %1259 = vmatpush1.msra.mxu0 0.0
        %1260 = vmatprep.subr.mxu0 0.0
        %1261 = vmatpush1.msra.mxu0 0.0
        %1262 = vmatprep.subr.mxu0 0.0
        %1263 = vmatpush1.msra.mxu0 0.0
        %1264 = vmatprep.subr.mxu0 0.0
        %1265 = vmatpush1.msra.mxu0 0.0
        %1266 = vmatprep.subr.mxu0 0.0
        %1267 = vmatpush1.msra.mxu0 0.0
        %1268 = vmatprep.subr.mxu0 0.0
        %1269 = vmatpush1.msra.mxu0 0.0
        %1270 = vmatprep.subr.mxu0 0.0
        %1271 = vmatpush1.msra.mxu0 0.0
        %1272 = vmatprep.subr.mxu0 0.0
        %1273 = vmatpush1.msra.mxu0 0.0
        %1274 = vmatprep.subr.mxu0 0.0
        %1275 = vmatpush1.msra.mxu0 0.0
        %1276 = vmatprep.subr.mxu0 0.0
        %1277 = vmatpush1.msra.mxu0 0.0
        %1278 = vmatprep.subr.mxu0 0.0
        %1279 = vmatpush1.msra.mxu0 0.0
        %1280 = vmatprep.subr.mxu0 0.0
        %1281 = vmatpush1.msra.mxu0 0.0
        %1282 = vmatprep.subr.mxu0 0.0
        %1283 = vmatpush1.msra.mxu0 0.0
        %1284 = vmatprep.subr.mxu0 0.0
        %1285 = vmatpush1.msra.mxu0 0.0
        %1286 = vmatprep.subr.mxu0 0.0
        %1287 = vmatpush1.msra.mxu0 0.0
        %1288 = vmatprep.subr.mxu0 0.0
        %1289 = vmatpush1.msra.mxu0 0.0
        %1290 = vmatprep.subr.mxu0 0.0
        %1291 = vmatpush1.msra.mxu0 0.0
        %1292 = vmatprep.subr.mxu0 0.0
        %1293 = vmatpush1.msra.mxu0 0.0
        %1294 = vmatprep.mubr.f32.mxu0 0.0
        %1295 = vmatmul.mubr.f32.gmra.mrb[0].mxu0 %v1228
        %v1296 = vpop.f32.mrb[0].mxu0
        %v1297 = vadd.f32 %v1224, %v1296
        %v1298 = vpop.f32.mrb[0].mxu0
        %1299 = vdwg.mxu0
        %1300 = vrot.lane.b32.xlu0 %v809, 64
        %v1301 = vpop.permute.xlu0 %1300
        %1302 = vrot.lane.b32.xlu0 %v808, 96
        %v1303 = vpop.permute.xlu0 %1302
        %v1304 = vsel %vm827, %v1301, 0
        %v1306 = vsel %vm827, %v1303, 0
        %1308 = vmatprep.subr.mxu0 0.0
        %1309 = vmatpush1.xpose.msra.mxu0 %v1306
        %1310 = vmatprep.subr.mxu0 0.0
        %1311 = vmatpush1.xpose.msra.mxu0 0.0
        %1312 = vmatprep.subr.mxu0 0.0
        %1313 = vmatpush1.xpose.msra.mxu0 0.0
        %1314 = vmatprep.subr.mxu0 0.0
        %1315 = vmatpush1.xpose.msra.mxu0 0.0
        %1316 = vmatprep.subr.mxu0 0.0
        %1317 = vmatpush1.xpose.msra.mxu0 0.0
        %1318 = vmatprep.subr.mxu0 0.0
        %1319 = vmatpush1.xpose.msra.mxu0 0.0
        %1320 = vmatprep.subr.mxu0 0.0
        %1321 = vmatpush1.xpose.msra.mxu0 0.0
        %1322 = vmatprep.subr.mxu0 0.0
        %1323 = vmatpush1.xpose.msra.mxu0 0.0
        %1324 = vmatprep.subr.mxu0 0.0
        %1325 = vmatpush1.xpose.msra.mxu0 0.0
        %1326 = vmatprep.subr.mxu0 0.0
        %1327 = vmatpush1.xpose.msra.mxu0 0.0
        %1328 = vmatprep.subr.mxu0 0.0
        %1329 = vmatpush1.xpose.msra.mxu0 0.0
        %1330 = vmatprep.subr.mxu0 0.0
        %1331 = vmatpush1.xpose.msra.mxu0 0.0
        %1332 = vmatprep.subr.mxu0 0.0
        %1333 = vmatpush1.xpose.msra.mxu0 0.0
        %1334 = vmatprep.subr.mxu0 0.0
        %1335 = vmatpush1.xpose.msra.mxu0 0.0
        %1336 = vmatprep.subr.mxu0 0.0
        %1337 = vmatpush1.xpose.msra.mxu0 0.0
        %1338 = vmatprep.subr.mxu0 0.0
        %1339 = vmatpush1.xpose.msra.mxu0 0.0
        %1340 = vmatprep.subr.mxu0 0.0
        %1341 = vmatpush1.xpose.msra.mxu0 0.0
        %1342 = vmatprep.subr.mxu0 0.0
        %1343 = vmatpush1.xpose.msra.mxu0 0.0
        %1344 = vmatprep.subr.mxu0 0.0
        %1345 = vmatpush1.xpose.msra.mxu0 0.0
        %1346 = vmatprep.subr.mxu0 0.0
        %1347 = vmatpush1.xpose.msra.mxu0 0.0
        %1348 = vmatprep.subr.mxu0 0.0
        %1349 = vmatpush1.xpose.msra.mxu0 0.0
        %1350 = vmatprep.subr.mxu0 0.0
        %1351 = vmatpush1.xpose.msra.mxu0 0.0
        %1352 = vmatprep.subr.mxu0 0.0
        %1353 = vmatpush1.xpose.msra.mxu0 0.0
        %1354 = vmatprep.subr.mxu0 0.0
        %1355 = vmatpush1.xpose.msra.mxu0 0.0
        %1356 = vmatprep.subr.mxu0 0.0
        %1357 = vmatpush1.xpose.msra.mxu0 0.0
        %1358 = vmatprep.subr.mxu0 0.0
        %1359 = vmatpush1.xpose.msra.mxu0 0.0
        %1360 = vmatprep.subr.mxu0 0.0
        %1361 = vmatpush1.xpose.msra.mxu0 0.0
        %1362 = vmatprep.subr.mxu0 0.0
        %1363 = vmatpush1.xpose.msra.mxu0 0.0
        %1364 = vmatprep.subr.mxu0 0.0
        %1365 = vmatpush1.xpose.msra.mxu0 0.0
        %1366 = vmatprep.subr.mxu0 0.0
        %1367 = vmatpush1.xpose.msra.mxu0 0.0
        %1368 = vmatprep.subr.mxu0 0.0
        %1369 = vmatpush1.xpose.msra.mxu0 0.0
        %1370 = vmatprep.subr.mxu0 0.0
        %1371 = vmatpush1.xpose.msra.mxu0 0.0
        %1372 = vmatprep.mubr.f32.mxu0 0.0
        %1373 = vmatmul.mubr.f32.gmra.mrb[0].mxu0 %v1304
        %v1374 = vpop.f32.mrb[0].mxu0
        %v1375 = vadd.f32 %v810, %v1374
        %v1376 = vpop.f32.mrb[0].mxu0
        %1377 = vdwg.mxu0
        %v1378 = vsel %vm904, %v1375, -inf
        %1379 = vmax.xlane.f32.xlu0 %v1378
        %v1380 = vpop.xlane.xlu0 %1379
        %v1381 = vsub.f32 %v1375, %v1380
        %v1382 = vmul.f32 %v1381, 1.442695
        %v1383 = vpow.pop %v1382
        %v1384 = vsel %vm904, %v1383, 0.0
        %1385 = vadd.xlane.f32.xlu0 %v1384
        %v1386 = vpop.xlane.xlu0 %1385
        %v1387 = vrcp.pop %v1386
        %v1388 = vmul.f32 %v1383, %v1387
        %s1389 = scalar_lea.vmem %s404, 16 [#allocation8]
        %1390 = vst.msk [vmem:[%s1389] sm:$0xff] %vm904, %v1388
        %1391 = vrot.lane.b32.xlu0 %v503, 32
        %v1392 = vpop.permute.xlu0 %1391
        %v1395 = vsel %vm904, %v1388, 0
        %1397 = vmatprep.subr.mxu0 0.0
        %1398 = vmatpush1.msra.mxu0 %v1392
        %1399 = vmatprep.subr.mxu0 0.0
        %1400 = vmatpush1.msra.mxu0 0.0
        %1401 = vmatprep.subr.mxu0 0.0
        %1402 = vmatpush1.msra.mxu0 0.0
        %1403 = vmatprep.subr.mxu0 0.0
        %1404 = vmatpush1.msra.mxu0 0.0
        %1405 = vmatprep.subr.mxu0 0.0
        %1406 = vmatpush1.msra.mxu0 0.0
        %1407 = vmatprep.subr.mxu0 0.0
        %1408 = vmatpush1.msra.mxu0 0.0
        %1409 = vmatprep.subr.mxu0 0.0
        %1410 = vmatpush1.msra.mxu0 0.0
        %1411 = vmatprep.subr.mxu0 0.0
        %1412 = vmatpush1.msra.mxu0 0.0
        %1413 = vmatprep.subr.mxu0 0.0
        %1414 = vmatpush1.msra.mxu0 0.0
        %1415 = vmatprep.subr.mxu0 0.0
        %1416 = vmatpush1.msra.mxu0 0.0
        %1417 = vmatprep.subr.mxu0 0.0
        %1418 = vmatpush1.msra.mxu0 0.0
        %1419 = vmatprep.subr.mxu0 0.0
        %1420 = vmatpush1.msra.mxu0 0.0
        %1421 = vmatprep.subr.mxu0 0.0
        %1422 = vmatpush1.msra.mxu0 0.0
        %1423 = vmatprep.subr.mxu0 0.0
        %1424 = vmatpush1.msra.mxu0 0.0
        %1425 = vmatprep.subr.mxu0 0.0
        %1426 = vmatpush1.msra.mxu0 0.0
        %1427 = vmatprep.subr.mxu0 0.0
        %1428 = vmatpush1.msra.mxu0 0.0
        %1429 = vmatprep.subr.mxu0 0.0
        %1430 = vmatpush1.msra.mxu0 0.0
        %1431 = vmatprep.subr.mxu0 0.0
        %1432 = vmatpush1.msra.mxu0 0.0
        %1433 = vmatprep.subr.mxu0 0.0
        %1434 = vmatpush1.msra.mxu0 0.0
        %1435 = vmatprep.subr.mxu0 0.0
        %1436 = vmatpush1.msra.mxu0 0.0
        %1437 = vmatprep.subr.mxu0 0.0
        %1438 = vmatpush1.msra.mxu0 0.0
        %1439 = vmatprep.subr.mxu0 0.0
        %1440 = vmatpush1.msra.mxu0 0.0
        %1441 = vmatprep.subr.mxu0 0.0
        %1442 = vmatpush1.msra.mxu0 0.0
        %1443 = vmatprep.subr.mxu0 0.0
        %1444 = vmatpush1.msra.mxu0 0.0
        %1445 = vmatprep.subr.mxu0 0.0
        %1446 = vmatpush1.msra.mxu0 0.0
        %1447 = vmatprep.subr.mxu0 0.0
        %1448 = vmatpush1.msra.mxu0 0.0
        %1449 = vmatprep.subr.mxu0 0.0
        %1450 = vmatpush1.msra.mxu0 0.0
        %1451 = vmatprep.subr.mxu0 0.0
        %1452 = vmatpush1.msra.mxu0 0.0
        %1453 = vmatprep.subr.mxu0 0.0
        %1454 = vmatpush1.msra.mxu0 0.0
        %1455 = vmatprep.subr.mxu0 0.0
        %1456 = vmatpush1.msra.mxu0 0.0
        %1457 = vmatprep.subr.mxu0 0.0
        %1458 = vmatpush1.msra.mxu0 0.0
        %1459 = vmatprep.subr.mxu0 0.0
        %1460 = vmatpush1.msra.mxu0 0.0
        %1461 = vmatprep.mubr.f32.mxu0 0.0
        %1462 = vmatmul.mubr.f32.gmra.mrb[0].mxu0 %v1395
        %v1463 = vpop.f32.mrb[0].mxu0
        %v1464 = vadd.f32 0.0, %v1463
        %v1465 = vpop.f32.mrb[0].mxu0
        %1466 = vdwg.mxu0
        %v1468 = vsel %vm827, %v1464, 0
        %1470 = vmatprep.subr.mxu0 0.0
        %1471 = vmatpush1.msra.mxu0 %v819
        %1472 = vmatprep.subr.mxu0 0.0
        %1473 = vmatpush1.msra.mxu0 %v820
        %1474 = vmatprep.subr.mxu0 0.0
        %1475 = vmatpush1.msra.mxu0 %v821
        %1476 = vmatprep.subr.mxu0 0.0
        %1477 = vmatpush1.msra.mxu0 %v822
        %1478 = vmatprep.subr.mxu0 0.0
        %1479 = vmatpush1.msra.mxu0 0.0
        %1480 = vmatprep.subr.mxu0 0.0
        %1481 = vmatpush1.msra.mxu0 0.0
        %1482 = vmatprep.subr.mxu0 0.0
        %1483 = vmatpush1.msra.mxu0 0.0
        %1484 = vmatprep.subr.mxu0 0.0
        %1485 = vmatpush1.msra.mxu0 0.0
        %1486 = vmatprep.subr.mxu0 0.0
        %1487 = vmatpush1.msra.mxu0 0.0
        %1488 = vmatprep.subr.mxu0 0.0
        %1489 = vmatpush1.msra.mxu0 0.0
        %1490 = vmatprep.subr.mxu0 0.0
        %1491 = vmatpush1.msra.mxu0 0.0
        %1492 = vmatprep.subr.mxu0 0.0
        %1493 = vmatpush1.msra.mxu0 0.0
        %1494 = vmatprep.subr.mxu0 0.0
        %1495 = vmatpush1.msra.mxu0 0.0
        %1496 = vmatprep.subr.mxu0 0.0
        %1497 = vmatpush1.msra.mxu0 0.0
        %1498 = vmatprep.subr.mxu0 0.0
        %1499 = vmatpush1.msra.mxu0 0.0
        %1500 = vmatprep.subr.mxu0 0.0
        %1501 = vmatpush1.msra.mxu0 0.0
        %1502 = vmatprep.subr.mxu0 0.0
        %1503 = vmatpush1.msra.mxu0 0.0
        %1504 = vmatprep.subr.mxu0 0.0
        %1505 = vmatpush1.msra.mxu0 0.0
        %1506 = vmatprep.subr.mxu0 0.0
        %1507 = vmatpush1.msra.mxu0 0.0
        %1508 = vmatprep.subr.mxu0 0.0
        %1509 = vmatpush1.msra.mxu0 0.0
        %1510 = vmatprep.subr.mxu0 0.0
        %1511 = vmatpush1.msra.mxu0 0.0
        %1512 = vmatprep.subr.mxu0 0.0
        %1513 = vmatpush1.msra.mxu0 0.0
        %1514 = vmatprep.subr.mxu0 0.0
        %1515 = vmatpush1.msra.mxu0 0.0
        %1516 = vmatprep.subr.mxu0 0.0
        %1517 = vmatpush1.msra.mxu0 0.0
        %1518 = vmatprep.subr.mxu0 0.0
        %1519 = vmatpush1.msra.mxu0 0.0
        %1520 = vmatprep.subr.mxu0 0.0
        %1521 = vmatpush1.msra.mxu0 0.0
        %1522 = vmatprep.subr.mxu0 0.0
        %1523 = vmatpush1.msra.mxu0 0.0
        %1524 = vmatprep.subr.mxu0 0.0
        %1525 = vmatpush1.msra.mxu0 0.0
        %1526 = vmatprep.subr.mxu0 0.0
        %1527 = vmatpush1.msra.mxu0 0.0
        %1528 = vmatprep.subr.mxu0 0.0
        %1529 = vmatpush1.msra.mxu0 0.0
        %1530 = vmatprep.subr.mxu0 0.0
        %1531 = vmatpush1.msra.mxu0 0.0
        %1532 = vmatprep.subr.mxu0 0.0
        %1533 = vmatpush1.msra.mxu0 0.0
        %1534 = vmatprep.mubr.f32.mxu0 0.0
        %1535 = vmatmul.mubr.f32.gmra.mrb[0].mxu0 %v1468
        %v1536 = vpop.f32.mrb[0].mxu0
        %v1537 = vadd.f32 0.0, %v1536
        %v1538 = vpop.f32.mrb[0].mxu0
        %1539 = vdwg.mxu0
        %v1540 = vadd.f32 %v1297, %v1537
        %1541 = vrot.lane.b32.xlu0 %v809, 32
        %v1542 = vpop.permute.xlu0 %1541
        %v1543 = vsel %vm827, %v1542, 0
        %1545 = vmatprep.subr.mxu0 0.0
        %1546 = vmatpush1.xpose.msra.mxu0 %v1306
        %1547 = vmatprep.subr.mxu0 0.0
        %1548 = vmatpush1.xpose.msra.mxu0 0.0
        %1549 = vmatprep.subr.mxu0 0.0
        %1550 = vmatpush1.xpose.msra.mxu0 0.0
        %1551 = vmatprep.subr.mxu0 0.0
        %1552 = vmatpush1.xpose.msra.mxu0 0.0
        %1553 = vmatprep.subr.mxu0 0.0
        %1554 = vmatpush1.xpose.msra.mxu0 0.0
        %1555 = vmatprep.subr.mxu0 0.0
        %1556 = vmatpush1.xpose.msra.mxu0 0.0
        %1557 = vmatprep.subr.mxu0 0.0
        %1558 = vmatpush1.xpose.msra.mxu0 0.0
        %1559 = vmatprep.subr.mxu0 0.0
        %1560 = vmatpush1.xpose.msra.mxu0 0.0
        %1561 = vmatprep.subr.mxu0 0.0
        %1562 = vmatpush1.xpose.msra.mxu0 0.0
        %1563 = vmatprep.subr.mxu0 0.0
        %1564 = vmatpush1.xpose.msra.mxu0 0.0
        %1565 = vmatprep.subr.mxu0 0.0
        %1566 = vmatpush1.xpose.msra.mxu0 0.0
        %1567 = vmatprep.subr.mxu0 0.0
        %1568 = vmatpush1.xpose.msra.mxu0 0.0
        %1569 = vmatprep.subr.mxu0 0.0
        %1570 = vmatpush1.xpose.msra.mxu0 0.0
        %1571 = vmatprep.subr.mxu0 0.0
        %1572 = vmatpush1.xpose.msra.mxu0 0.0
        %1573 = vmatprep.subr.mxu0 0.0
        %1574 = vmatpush1.xpose.msra.mxu0 0.0
        %1575 = vmatprep.subr.mxu0 0.0
        %1576 = vmatpush1.xpose.msra.mxu0 0.0
        %1577 = vmatprep.subr.mxu0 0.0
        %1578 = vmatpush1.xpose.msra.mxu0 0.0
        %1579 = vmatprep.subr.mxu0 0.0
        %1580 = vmatpush1.xpose.msra.mxu0 0.0
        %1581 = vmatprep.subr.mxu0 0.0
        %1582 = vmatpush1.xpose.msra.mxu0 0.0
        %1583 = vmatprep.subr.mxu0 0.0
        %1584 = vmatpush1.xpose.msra.mxu0 0.0
        %1585 = vmatprep.subr.mxu0 0.0
        %1586 = vmatpush1.xpose.msra.mxu0 0.0
        %1587 = vmatprep.subr.mxu0 0.0
        %1588 = vmatpush1.xpose.msra.mxu0 0.0
        %1589 = vmatprep.subr.mxu0 0.0
        %1590 = vmatpush1.xpose.msra.mxu0 0.0
        %1591 = vmatprep.subr.mxu0 0.0
        %1592 = vmatpush1.xpose.msra.mxu0 0.0
        %1593 = vmatprep.subr.mxu0 0.0
        %1594 = vmatpush1.xpose.msra.mxu0 0.0
        %1595 = vmatprep.subr.mxu0 0.0
        %1596 = vmatpush1.xpose.msra.mxu0 0.0
        %1597 = vmatprep.subr.mxu0 0.0
        %1598 = vmatpush1.xpose.msra.mxu0 0.0
        %1599 = vmatprep.subr.mxu0 0.0
        %1600 = vmatpush1.xpose.msra.mxu0 0.0
        %1601 = vmatprep.subr.mxu0 0.0
        %1602 = vmatpush1.xpose.msra.mxu0 0.0
        %1603 = vmatprep.subr.mxu0 0.0
        %1604 = vmatpush1.xpose.msra.mxu0 0.0
        %1605 = vmatprep.subr.mxu0 0.0
        %1606 = vmatpush1.xpose.msra.mxu0 0.0
        %1607 = vmatprep.subr.mxu0 0.0
        %1608 = vmatpush1.xpose.msra.mxu0 0.0
        %1609 = vmatprep.mubr.f32.mxu0 0.0
        %1610 = vmatmul.mubr.f32.gmra.mrb[0].mxu0 %v1543
        %v1611 = vpop.f32.mrb[0].mxu0
        %v1612 = vadd.f32 %v810, %v1611
        %v1613 = vpop.f32.mrb[0].mxu0
        %1614 = vdwg.mxu0
        %v1615 = vsel %vm904, %v1612, -inf
        %1616 = vmax.xlane.f32.xlu0 %v1615
        %v1617 = vpop.xlane.xlu0 %1616
        %v1618 = vsub.f32 %v1612, %v1617
        %v1619 = vmul.f32 %v1618, 1.442695
        %v1620 = vpow.pop %v1619
        %v1621 = vsel %vm904, %v1620, 0.0
        %1622 = vadd.xlane.f32.xlu0 %v1621
        %v1623 = vpop.xlane.xlu0 %1622
        %v1624 = vrcp.pop %v1623
        %v1625 = vmul.f32 %v1620, %v1624
        %s1626 = scalar_lea.vmem %s404, 24 [#allocation8]
        %1627 = vst.msk [vmem:[%s1626] sm:$0xff] %vm904, %v1625
        %v1629 = vsel %vm904, %v1625, 0
        %1631 = vmatprep.subr.mxu0 0.0
        %1632 = vmatpush1.msra.mxu0 %v1392
        %1633 = vmatprep.subr.mxu0 0.0
        %1634 = vmatpush1.msra.mxu0 0.0
        %1635 = vmatprep.subr.mxu0 0.0
        %1636 = vmatpush1.msra.mxu0 0.0
        %1637 = vmatprep.subr.mxu0 0.0
        %1638 = vmatpush1.msra.mxu0 0.0
        %1639 = vmatprep.subr.mxu0 0.0
        %1640 = vmatpush1.msra.mxu0 0.0
        %1641 = vmatprep.subr.mxu0 0.0
        %1642 = vmatpush1.msra.mxu0 0.0
        %1643 = vmatprep.subr.mxu0 0.0
        %1644 = vmatpush1.msra.mxu0 0.0
        %1645 = vmatprep.subr.mxu0 0.0
        %1646 = vmatpush1.msra.mxu0 0.0
        %1647 = vmatprep.subr.mxu0 0.0
        %1648 = vmatpush1.msra.mxu0 0.0
        %1649 = vmatprep.subr.mxu0 0.0
        %1650 = vmatpush1.msra.mxu0 0.0
        %1651 = vmatprep.subr.mxu0 0.0
        %1652 = vmatpush1.msra.mxu0 0.0
        %1653 = vmatprep.subr.mxu0 0.0
        %1654 = vmatpush1.msra.mxu0 0.0
        %1655 = vmatprep.subr.mxu0 0.0
        %1656 = vmatpush1.msra.mxu0 0.0
        %1657 = vmatprep.subr.mxu0 0.0
        %1658 = vmatpush1.msra.mxu0 0.0
        %1659 = vmatprep.subr.mxu0 0.0
        %1660 = vmatpush1.msra.mxu0 0.0
        %1661 = vmatprep.subr.mxu0 0.0
        %1662 = vmatpush1.msra.mxu0 0.0
        %1663 = vmatprep.subr.mxu0 0.0
        %1664 = vmatpush1.msra.mxu0 0.0
        %1665 = vmatprep.subr.mxu0 0.0
        %1666 = vmatpush1.msra.mxu0 0.0
        %1667 = vmatprep.subr.mxu0 0.0
        %1668 = vmatpush1.msra.mxu0 0.0
        %1669 = vmatprep.subr.mxu0 0.0
        %1670 = vmatpush1.msra.mxu0 0.0
        %1671 = vmatprep.subr.mxu0 0.0
        %1672 = vmatpush1.msra.mxu0 0.0
        %1673 = vmatprep.subr.mxu0 0.0
        %1674 = vmatpush1.msra.mxu0 0.0
        %1675 = vmatprep.subr.mxu0 0.0
        %1676 = vmatpush1.msra.mxu0 0.0
        %1677 = vmatprep.subr.mxu0 0.0
        %1678 = vmatpush1.msra.mxu0 0.0
        %1679 = vmatprep.subr.mxu0 0.0
        %1680 = vmatpush1.msra.mxu0 0.0
        %1681 = vmatprep.subr.mxu0 0.0
        %1682 = vmatpush1.msra.mxu0 0.0
        %1683 = vmatprep.subr.mxu0 0.0
        %1684 = vmatpush1.msra.mxu0 0.0
        %1685 = vmatprep.subr.mxu0 0.0
        %1686 = vmatpush1.msra.mxu0 0.0
        %1687 = vmatprep.subr.mxu0 0.0
        %1688 = vmatpush1.msra.mxu0 0.0
        %1689 = vmatprep.subr.mxu0 0.0
        %1690 = vmatpush1.msra.mxu0 0.0
        %1691 = vmatprep.subr.mxu0 0.0
        %1692 = vmatpush1.msra.mxu0 0.0
        %1693 = vmatprep.subr.mxu0 0.0
        %1694 = vmatpush1.msra.mxu0 0.0
        %1695 = vmatprep.mubr.f32.mxu0 0.0
        %1696 = vmatmul.mubr.f32.gmra.mrb[0].mxu0 %v1629
        %v1697 = vpop.f32.mrb[0].mxu0
        %v1698 = vadd.f32 0.0, %v1697
        %v1699 = vpop.f32.mrb[0].mxu0
        %1700 = vdwg.mxu0
        %v1702 = vsel %vm827, %v1698, 0
        %1704 = vmatprep.subr.mxu0 0.0
        %1705 = vmatpush1.msra.mxu0 %v823
        %1706 = vmatprep.subr.mxu0 0.0
        %1707 = vmatpush1.msra.mxu0 %v824
        %1708 = vmatprep.subr.mxu0 0.0
        %1709 = vmatpush1.msra.mxu0 %v825
        %1710 = vmatprep.subr.mxu0 0.0
        %1711 = vmatpush1.msra.mxu0 %v826
        %1712 = vmatprep.subr.mxu0 0.0
        %1713 = vmatpush1.msra.mxu0 0.0
        %1714 = vmatprep.subr.mxu0 0.0
        %1715 = vmatpush1.msra.mxu0 0.0
        %1716 = vmatprep.subr.mxu0 0.0
        %1717 = vmatpush1.msra.mxu0 0.0
        %1718 = vmatprep.subr.mxu0 0.0
        %1719 = vmatpush1.msra.mxu0 0.0
        %1720 = vmatprep.subr.mxu0 0.0
        %1721 = vmatpush1.msra.mxu0 0.0
        %1722 = vmatprep.subr.mxu0 0.0
        %1723 = vmatpush1.msra.mxu0 0.0
        %1724 = vmatprep.subr.mxu0 0.0
        %1725 = vmatpush1.msra.mxu0 0.0
        %1726 = vmatprep.subr.mxu0 0.0
        %1727 = vmatpush1.msra.mxu0 0.0
        %1728 = vmatprep.subr.mxu0 0.0
        %1729 = vmatpush1.msra.mxu0 0.0
        %1730 = vmatprep.subr.mxu0 0.0
        %1731 = vmatpush1.msra.mxu0 0.0
        %1732 = vmatprep.subr.mxu0 0.0
        %1733 = vmatpush1.msra.mxu0 0.0
        %1734 = vmatprep.subr.mxu0 0.0
        %1735 = vmatpush1.msra.mxu0 0.0
        %1736 = vmatprep.subr.mxu0 0.0
        %1737 = vmatpush1.msra.mxu0 0.0
        %1738 = vmatprep.subr.mxu0 0.0
        %1739 = vmatpush1.msra.mxu0 0.0
        %1740 = vmatprep.subr.mxu0 0.0
        %1741 = vmatpush1.msra.mxu0 0.0
        %1742 = vmatprep.subr.mxu0 0.0
        %1743 = vmatpush1.msra.mxu0 0.0
        %1744 = vmatprep.subr.mxu0 0.0
        %1745 = vmatpush1.msra.mxu0 0.0
        %1746 = vmatprep.subr.mxu0 0.0
        %1747 = vmatpush1.msra.mxu0 0.0
        %1748 = vmatprep.subr.mxu0 0.0
        %1749 = vmatpush1.msra.mxu0 0.0
        %1750 = vmatprep.subr.mxu0 0.0
        %1751 = vmatpush1.msra.mxu0 0.0
        %1752 = vmatprep.subr.mxu0 0.0
        %1753 = vmatpush1.msra.mxu0 0.0
        %1754 = vmatprep.subr.mxu0 0.0
        %1755 = vmatpush1.msra.mxu0 0.0
        %1756 = vmatprep.subr.mxu0 0.0
        %1757 = vmatpush1.msra.mxu0 0.0
        %1758 = vmatprep.subr.mxu0 0.0
        %1759 = vmatpush1.msra.mxu0 0.0
        %1760 = vmatprep.subr.mxu0 0.0
        %1761 = vmatpush1.msra.mxu0 0.0
        %1762 = vmatprep.subr.mxu0 0.0
        %1763 = vmatpush1.msra.mxu0 0.0
        %1764 = vmatprep.subr.mxu0 0.0
        %1765 = vmatpush1.msra.mxu0 0.0
        %1766 = vmatprep.subr.mxu0 0.0
        %1767 = vmatpush1.msra.mxu0 0.0
        %1768 = vmatprep.mubr.f32.mxu0 0.0
        %1769 = vmatmul.mubr.f32.gmra.mrb[0].mxu0 %v1702
        %v1770 = vpop.f32.mrb[0].mxu0
        %v1771 = vadd.f32 0.0, %v1770
        %v1772 = vpop.f32.mrb[0].mxu0
        %1773 = vdwg.mxu0
        %v1774 = vadd.f32 %v1540, %v1771
        %1775 = vst.msk [vmem:[%s397] sm:$0xff] %vm430, %v1774
        %s1776 = sand.u32 %s237, 1
        %s1777 = scalar_lea.sflag [#allocation4], %s1776
        %s1778 = sand.u32 %s237, 1
        %s1779 = smul.addr %s1778, 8
        %s1780 = scalar_lea.vmem [#allocation7], %s1779
        %s1781 = sand.u32 %s263, 1
        %s1782 = scalar_lea.sflag [#allocation9], %s1781
        %s1783 = sand.u32 %s263, 1
        %s1784 = smul.addr %s1783, 32
        %s1785 = scalar_lea.vmem [#allocation8], %s1784
        // Predicated region
        $region65: #{tpu_custom_call.1} parent=55 // pred_check
          %p1786 = pneg %p247
        $region66: #{tpu_custom_call.1} parent=55 // pred_check_branch
          %1788 = sbr.rel (%p1786) target = $region68
        $region67: #{tpu_custom_call.1} parent=55 // pred_region
          %s1790 = ssub.s32 128, 128
          %1791 = vsyncadd %s1777, %s1790
          %s1792 = smul.addr %s30, 128
          %s1793 = scalar_lea.hbm %s9, %s1792
          %s1795 = sshll.u32 %s1780, 4
          %s1796 = int_to_ptr.vmem [resolvable:$true] %s1795
          %1798 = dma.vmem_to_hbm [thread:$0]  %s1796, 128, %s1793, %s1777
        $region68: #{tpu_custom_call.1} parent=55 // pred_fallthru
          _
        // Predicated region
        $region69: #{tpu_custom_call.1} parent=55 // pred_check
          %p1799 = pneg %p273
        $region70: #{tpu_custom_call.1} parent=55 // pred_check_branch
          %1801 = sbr.rel (%p1799) target = $region72
        $region71: #{tpu_custom_call.1} parent=55 // pred_region
          %s1803 = ssub.s32 512, 512
          %1804 = vsyncadd %s1782, %s1803
          %s1805 = smul.addr %s30, 4
          %s1806 = smul.addr %s1805, 128
          %s1807 = scalar_lea.hbm %s10, %s1806
          %s1808 = sshll.u32 %s1785, 4
          %s1809 = int_to_ptr.vmem [resolvable:$true] %s1808
          %1814 = dma.vmem_to_hbm [thread:$0]  %s1809, 512, %s1807, %s1782, 128, 128, 8
        $region72: #{tpu_custom_call.1} parent=55 // pred_fallthru
          _
      $region56: #{tpu_custom_call.1} parent=5 // pred_fallthru
        _
      %p1815 = scmp.le.s32.totalorder 2, %s25
      // Predicated region
      $region73: #{tpu_custom_call.1} parent=5 // pred_check
        %p1816 = pneg %p1815
      $region74: #{tpu_custom_call.1} parent=5 // pred_check_branch
        %1818 = sbr.rel (%p1816) target = $region76
      $region75: #{tpu_custom_call.1} parent=5 // pred_region
        %s1819 = ssub.s32 %s25, 2
        // Predicated region
        $region77: #{tpu_custom_call.1} parent=75 // pred_check
          %p1820 = pneg %p253
        $region78: #{tpu_custom_call.1} parent=75 // pred_check_branch
          %1822 = sbr.rel (%p1820) target = $region80
        $region79: #{tpu_custom_call.1} parent=75 // pred_region
          %s1823 = sand.u32 %s238, 1
          %s1824 = scalar_lea.sflag [#allocation4], %s1823
          %s1825 = sand.u32 %s238, 1
          %s1826 = smul.addr %s1825, 8
          %s1827 = scalar_lea.vmem [#allocation7], %s1826
          %1828 = dma.done %s1824, 128
        $region80: #{tpu_custom_call.1} parent=75 // pred_fallthru
          _
        // Predicated region
        $region81: #{tpu_custom_call.1} parent=75 // pred_check
          %p1829 = pneg %p279
        $region82: #{tpu_custom_call.1} parent=75 // pred_check_branch
          %1831 = sbr.rel (%p1829) target = $region84
        $region83: #{tpu_custom_call.1} parent=75 // pred_region
          %s1832 = sand.u32 %s264, 1
          %s1833 = scalar_lea.sflag [#allocation9], %s1832
          %s1834 = sand.u32 %s264, 1
          %s1835 = smul.addr %s1834, 32
          %s1836 = scalar_lea.vmem [#allocation8], %s1835
          %1837 = dma.done %s1833, 512
        $region84: #{tpu_custom_call.1} parent=75 // pred_fallthru
          _
      $region76: #{tpu_custom_call.1} parent=5 // pred_fallthru
        _
    $region6: #{tpu_custom_call.1} parent=1 // loop_footer
      %s29 = sadd.s32 1, %s25
    $region7: #{tpu_custom_call.1} parent=1 // loop_footer_branch
      %24 = sbr.rel target = $region3
    $region8: #{tpu_custom_call.1} parent=1 // loop_exit
      _
    %1838 = vsyncpa [#allocation3], 1
    %s1839 = scalar_lea.sflag [#allocation3], 1
    %1840 = vsyncpa %s1839, 1
    %1841 = vsyncpa [#allocation6], 1
    %1842 = vsyncpa [#allocation4], 1
    %s1843 = scalar_lea.sflag [#allocation4], 1
    %1844 = vsyncpa %s1843, 1
    %1845 = vsyncpa [#allocation9], 1
    %s1846 = scalar_lea.sflag [#allocation9], 1
    %1847 = vsyncpa %s1846, 1

</llo_original>
